<compile_context>
chip_gen: v5e
topology: v5e:2x2
jax: 0.10.0
libtpu: 0.0.40
codegen_flags: <defaults>
</compile_context>

<pallas_src>
import jax
import jax.numpy as jnp
from jax import lax
from jax.experimental import pallas as pl
from jax.experimental.pallas import tpu as pltpu


# ---------------------------------------------------------------------------
# Fused kernel: TB batch elements per grid step, everything VMEM-resident.
# Layout inside the kernel: channels on sublanes, flattened H*W on the lane axis.
# ---------------------------------------------------------------------------
def _make_fused_dense_layer_kernel(TB, H, W):
    HW = H * W
    # Lane-rotation amount that brings neighbor (h+dh, w+dw) to position (h, w);
    # tap order t = 3*(dh+1) + (dw+1) matches the wrapper's tapw construction.
    shifts = []
    for dh in (-1, 0, 1):
        for dw in (-1, 0, 1):
            shifts.append((-(dh * W + dw)) % HW)

    def kernel(x_ref, s1_ref, b1_ref, w1_ref, b2_ref, tapw_ref, wp_ref, o_ref):
        f32 = jnp.float32
        bf16 = jnp.bfloat16

        s1 = s1_ref[...]            # (Cin, 1)   f32  BN1 scale
        b1 = b1_ref[...]            # (Cin, 1)   f32  BN1 shift
        w1 = w1_ref[...]            # (Cmid, Cin) bf16 conv1 weight (BN2 scale folded in)
        b2 = b2_ref[...]            # (Cmid, 1)  f32  BN2 shift
        wp = wp_ref[...]            # (Cg, Cmid) bf16 pointwise weight

        def dwconv(v):              # v: (Cmid, HW) f32 -> (Cmid, HW) f32
            acc = None
            for t, sh in enumerate(shifts):
                u = v if sh == 0 else pltpu.roll(v, sh, axis=1)   # XLU lane rotation
                c = u * tapw_ref[t]                               # masked tap weight from VMEM
                acc = c if acc is None else acc + c
            return acc

        for b in range(TB):
            # ---- Stage A: BN1 + ReLU + 1x1 conv (single fat MXU dot) + BN2 shift + ReLU
            x = x_ref[b].astype(f32)                                        # (Cin, HW)
            h = jnp.maximum(x * s1 + b1, 0.0)
            y = jnp.dot(w1, h.astype(bf16), preferred_element_type=f32)    # (Cmid, HW)
            y = jnp.maximum(y + b2, 0.0)

            # ---- Stage B: CSDN_Tem = dw3x3(input) + dw3x3(dw3x3(input)), then pointwise 1x1
            d_once = dwconv(y)
            d_twice = dwconv(d_once)
            s = d_once + d_twice
            out = jnp.dot(wp, s.astype(bf16), preferred_element_type=f32)  # (Cg, HW)
            o_ref[b] = out.astype(o_ref.dtype)

    return kernel


def _pick_batch_tile(n, cap=8):
    """Largest per-step batch tile that still leaves >=2 grid steps (v7x dual-TC)."""
    tb = 1
    for d in range(1, min(n, cap) + 1):
        if n % d == 0 and n // d >= 2:
            tb = d
    return tb


# ---------------------------------------------------------------------------
# Wrapper: PyTorch-convention NCHW inputs; all per-call prep is tiny.
# ---------------------------------------------------------------------------
def dense_layer_forward(prev_features_nchw, params):
    eps = 1e-5
    if not isinstance(prev_features_nchw, (list, tuple)):
        prev_features_nchw = [prev_features_nchw]
    N, _, H, W = prev_features_nchw[0].shape
    HW = H * W

    # Single pre-concatenated (N, Cin_total, HW) input: one fat DMA per grid step and a
    # single fused Stage-A dot instead of S tiny low-contraction dots.
    x_cat = jnp.concatenate(
        [p.reshape(p.shape[0], p.shape[1], HW) for p in prev_features_nchw], axis=1)
    Cin = x_cat.shape[1]

    g1, be1, m1, v1 = params["bn1"]
    g2, be2, m2, v2 = params["bn2"]
    inv1 = g1 / jnp.sqrt(v1 + eps)
    sh1 = be1 - m1 * inv1
    inv2 = g2 / jnp.sqrt(v2 + eps)
    sh2 = be2 - m2 * inv2

    w1 = params["w1"][:, :, 0, 0]                 # (Cmid, Cin)
    wp = params["wp"][:, :, 0, 0]                 # (Cg, Cmid)
    wd = params["wd"][:, 0, :, :]                 # (Cmid, 3, 3) depthwise
    Cmid, Cg = w1.shape[0], wp.shape[0]

    # Fold BN2 scale into conv1 weight; bf16 MXU operands (f32 accumulate in-kernel).
    w1f = (w1 * inv2[:, None]).astype(jnp.bfloat16)
    wpb = wp.astype(jnp.bfloat16)
    s1 = inv1.reshape(Cin, 1)
    b1 = sh1.reshape(Cin, 1)
    b2 = sh2.reshape(Cmid, 1)

    # Precompute masked, lane-broadcast depthwise tap weights (9, Cmid, HW):
    # tapw[t, c, l] = wd[c, i, j] * mask_{(i-1, j-1)}(l), t = 3*i + j.
    # Hoists all masking / broadcast work out of BOTH in-kernel depthwise passes.
    pos = jnp.arange(HW, dtype=jnp.int32)
    hpos, wpos = pos // W, pos % W
    masks = []
    for dh in (-1, 0, 1):
        for dw in (-1, 0, 1):
            m = jnp.ones((HW,), jnp.float32)
            if dh == -1:
                m = m * (hpos >= 1)
            elif dh == 1:
                m = m * (hpos < H - 1)
            if dw == -1:
                m = m * (wpos >= 1)
            elif dw == 1:
                m = m * (wpos < W - 1)
            masks.append(m)
    mask = jnp.stack(masks)                               # (9, HW)
    kd = jnp.transpose(wd, (1, 2, 0)).reshape(9, Cmid)    # (9, Cmid), t = 3*i + j
    tapw = kd[:, :, None] * mask[:, None, :]              # (9, Cmid, HW) f32

    TB = _pick_batch_tile(N)
    kernel = _make_fused_dense_layer_kernel(TB, H, W)

    in_specs = [
        pl.BlockSpec((TB, Cin, HW), lambda n: (n, 0, 0)),      # x (per-step batch tile)
        pl.BlockSpec((Cin, 1), lambda n: (0, 0)),              # bn1 scale
        pl.BlockSpec((Cin, 1), lambda n: (0, 0)),              # bn1 shift
        pl.BlockSpec((Cmid, Cin), lambda n: (0, 0)),           # conv1 weight (bf16, BN2-scaled)
        pl.BlockSpec((Cmid, 1), lambda n: (0, 0)),             # bn2 shift
        pl.BlockSpec((9, Cmid, HW), lambda n: (0, 0, 0)),      # masked depthwise tap weights
        pl.BlockSpec((Cg, Cmid), lambda n: (0, 0)),            # pointwise weight (bf16)
    ]

    out = pl.pallas_call(
        kernel,
        out_shape=jax.ShapeDtypeStruct((N, Cg, HW), jnp.float32),
        grid=(N // TB,),
        in_specs=in_specs,
        out_specs=pl.BlockSpec((TB, Cg, HW), lambda n: (n, 0, 0)),
        compiler_params=pltpu.CompilerParams(
            dimension_semantics=("parallel",),          # batch-tile steps are independent
            vmem_limit_bytes=32 * 1024 * 1024),         # explicit, safe on v5e/v6e/v7x
    )(x_cat, s1, b1, w1f, b2, tapw, wpb)

    return out.reshape(N, Cg, H, W)                     # NCHW (no transpose needed)


# ---------------------------------------------------------------------------
# Pure-JAX reference (f32) for the correctness check
# ---------------------------------------------------------------------------
def dense_layer_reference(prev_features_nchw, params):
    eps = 1e-5
    x = jnp.concatenate(prev_features_nchw, axis=1)

    def bn(v, g, b, m, var):
        inv = g / jnp.sqrt(var + eps)
        return v * inv[None, :, None, None] + (b - m * inv)[None, :, None, None]

    h = jax.nn.relu(bn(x, *params["bn1"]))
    h = lax.conv_general_dilated(h, params["w1"], (1, 1), "VALID",
                                 dimension_numbers=("NCHW", "OIHW", "NCHW"))
    h = jax.nn.relu(bn(h, *params["bn2"]))

    def dw(v):
        return lax.conv_general_dilated(v, params["wd"], (1, 1), "SAME",
                                        dimension_numbers=("NCHW", "OIHW", "NCHW"),
                                        feature_group_count=v.shape[1])

    out2 = dw(h)
    out1 = dw(out2)
    s = out1 + out2
    return lax.conv_general_dilated(s, params["wp"], (1, 1), "VALID",
                                    dimension_numbers=("NCHW", "OIHW", "NCHW"))


# ---------------------------------------------------------------------------
if __name__ == "__main__":
    # _DenseLayer(num_input_features=8, growth_rate=4, bn_size=4, drop_rate=0.0)
    num_input_features, growth_rate, bn_size = 8, 4, 4
    Cin = num_input_features
    Cmid = bn_size * growth_rate      # 16
    Cg = growth_rate                  # 4
    N, H, W = 4, 16, 16               # N=4 -> TB=2, grid=(2,) "parallel" (keeps v7x's 2 TCs busy)

    key = jax.random.PRNGKey(0)
    keys = jax.random.split(key, 12)

    # prev_features: list of two NCHW tensors whose channels sum to num_input_features
    x1 = jax.random.normal(keys[0], (N, 4, H, W), jnp.float32)
    x2 = jax.random.normal(keys[1], (N, 4, H, W), jnp.float32)

    params = {
        "bn1": (jax.random.uniform(keys[2], (Cin,), jnp.float32, 0.5, 1.5),   # gamma
                jax.random.normal(keys[3], (Cin,), jnp.float32) * 0.1,        # beta
                jax.random.normal(keys[4], (Cin,), jnp.float32) * 0.1,        # running_mean
                jax.random.uniform(keys[5], (Cin,), jnp.float32, 0.5, 1.5)),  # running_var
        "w1": jax.random.normal(keys[6], (Cmid, Cin, 1, 1), jnp.float32) * 0.1,
        "bn2": (jax.random.uniform(keys[7], (Cmid,), jnp.float32, 0.5, 1.5),
                jax.random.normal(keys[8], (Cmid,), jnp.float32) * 0.1,
                jax.random.normal(keys[9], (Cmid,), jnp.float32) * 0.1,
                jax.random.uniform(keys[10], (Cmid,), jnp.float32, 0.5, 1.5)),
        "wd": jax.random.normal(keys[11], (Cmid, 1, 3, 3), jnp.float32) * 0.1,
        "wp": jax.random.normal(jax.random.PRNGKey(42), (Cg, Cmid, 1, 1), jnp.float32) * 0.1,
    }

    out = dense_layer_forward([x1, x2], params)
    out = jax.block_until_ready(out)

    ref = jax.block_until_ready(dense_layer_reference([x1, x2], params))
    assert out.shape == (N, Cg, H, W), out.shape
    # bf16 MXU operands (f32 accumulation) vs. an all-f32 reference: observed error is a few
    # 1e-3; 1e-2 still catches any tap/mask/layout bug (those produce >=1e-1 level errors).
    err = float(jnp.max(jnp.abs(out - ref)))
    assert jnp.allclose(out, ref, rtol=1e-2, atol=1e-2), err

    print("KERNEL_OK")
</pallas_src>

<mosaic_0001>
module attributes {stable_mosaic.version = 11 : i64} {
  func.func @kernel(%arg0: i32, %arg1: memref<2x8x256xf32, #tpu.memory_space<vmem>>, %arg2: memref<8x1xf32, #tpu.memory_space<vmem>>, %arg3: memref<8x1xf32, #tpu.memory_space<vmem>>, %arg4: memref<16x8xbf16, #tpu.memory_space<vmem>>, %arg5: memref<16x1xf32, #tpu.memory_space<vmem>>, %arg6: memref<9x16x256xf32, #tpu.memory_space<vmem>>, %arg7: memref<4x16xbf16, #tpu.memory_space<vmem>>, %arg8: memref<2x4x256xf32, #tpu.memory_space<vmem>>) attributes {dimension_semantics = [#tpu.dimension_semantics<parallel>], iteration_bounds = array<i64: 2>, scalar_prefetch = 0 : i64, scratch_operands = 0 : i64, tpu.core_type = #tpu.core_type<tc>, window_params = [{transform_indices = @transform_0, window_bounds = array<i64: 2, 8, 256>}, {pipeline_mode = #tpu.pipeline_mode<synchronous>, transform_indices = @transform_1, window_bounds = array<i64: 8, 1>}, {pipeline_mode = #tpu.pipeline_mode<synchronous>, transform_indices = @transform_2, window_bounds = array<i64: 8, 1>}, {pipeline_mode = #tpu.pipeline_mode<synchronous>, transform_indices = @transform_3, window_bounds = array<i64: 16, 8>}, {pipeline_mode = #tpu.pipeline_mode<synchronous>, transform_indices = @transform_4, window_bounds = array<i64: 16, 1>}, {pipeline_mode = #tpu.pipeline_mode<synchronous>, transform_indices = @transform_5, window_bounds = array<i64: 9, 16, 256>}, {pipeline_mode = #tpu.pipeline_mode<synchronous>, transform_indices = @transform_6, window_bounds = array<i64: 4, 16>}, {transform_indices = @transform_7, window_bounds = array<i64: 2, 4, 256>}]} {
    %c0 = arith.constant 0 : index
    %c0_0 = arith.constant 0 : index
    %0 = vector.load %arg2[%c0, %c0_0] : memref<8x1xf32, #tpu.memory_space<vmem>>, vector<8x1xf32>
    %c0_1 = arith.constant 0 : index
    %c0_2 = arith.constant 0 : index
    %1 = vector.load %arg3[%c0_1, %c0_2] : memref<8x1xf32, #tpu.memory_space<vmem>>, vector<8x1xf32>
    %c0_3 = arith.constant 0 : index
    %c0_4 = arith.constant 0 : index
    %2 = vector.load %arg4[%c0_3, %c0_4] : memref<16x8xbf16, #tpu.memory_space<vmem>>, vector<16x8xbf16>
    %c0_5 = arith.constant 0 : index
    %c0_6 = arith.constant 0 : index
    %3 = vector.load %arg5[%c0_5, %c0_6] : memref<16x1xf32, #tpu.memory_space<vmem>>, vector<16x1xf32>
    %c0_7 = arith.constant 0 : index
    %c0_8 = arith.constant 0 : index
    %4 = vector.load %arg7[%c0_7, %c0_8] : memref<4x16xbf16, #tpu.memory_space<vmem>>, vector<4x16xbf16>
    %c0_9 = arith.constant 0 : index
    %c0_10 = arith.constant 0 : index
    %c0_11 = arith.constant 0 : index
    %5 = vector.load %arg1[%c0_9, %c0_10, %c0_11] : memref<2x8x256xf32, #tpu.memory_space<vmem>>, vector<1x8x256xf32>
    %6 = vector.shape_cast %5 : vector<1x8x256xf32> to vector<8x256xf32>
    %7 = vector.broadcast %0 : vector<8x1xf32> to vector<8x256xf32>
    %8 = arith.mulf %6, %7 : vector<8x256xf32>
    %9 = vector.broadcast %1 : vector<8x1xf32> to vector<8x256xf32>
    %10 = arith.addf %8, %9 : vector<8x256xf32>
    %cst = arith.constant 0.000000e+00 : f32
    %11 = vector.broadcast %cst : f32 to vector<8x256xf32>
    %12 = arith.maximumf %10, %11 : vector<8x256xf32>
    %13 = arith.truncf %12 : vector<8x256xf32> to vector<8x256xbf16>
    %cst_12 = arith.constant dense<0.000000e+00> : vector<16x256xf32>
    %14 = tpu.matmul %2, %13, %cst_12 {dimension_numbers = #tpu.dot_dimension_numbers<[1], [0], [0], [1], [0, 0, 1, 1], [], []>} : vector<16x8xbf16>, vector<8x256xbf16>, vector<16x256xf32> -> vector<16x256xf32>
    %15 = vector.broadcast %3 : vector<16x1xf32> to vector<16x256xf32>
    %16 = arith.addf %14, %15 : vector<16x256xf32>
    %cst_13 = arith.constant 0.000000e+00 : f32
    %17 = vector.broadcast %cst_13 : f32 to vector<16x256xf32>
    %18 = arith.maximumf %16, %17 : vector<16x256xf32>
    %c17_i32 = arith.constant 17 : i32
    %19 = tpu.dynamic_rotate %18 by %c17_i32 dim 1 : vector<16x256xf32>, i32 -> vector<16x256xf32>
    %c0_14 = arith.constant 0 : index
    %c0_15 = arith.constant 0 : index
    %c0_16 = arith.constant 0 : index
    %20 = vector.load %arg6[%c0_14, %c0_15, %c0_16] : memref<9x16x256xf32, #tpu.memory_space<vmem>>, vector<1x16x256xf32>
    %21 = vector.shape_cast %20 : vector<1x16x256xf32> to vector<16x256xf32>
    %22 = arith.mulf %19, %21 : vector<16x256xf32>
    %c16_i32 = arith.constant 16 : i32
    %23 = tpu.dynamic_rotate %18 by %c16_i32 dim 1 : vector<16x256xf32>, i32 -> vector<16x256xf32>
    %c1 = arith.constant 1 : index
    %c0_17 = arith.constant 0 : index
    %c0_18 = arith.constant 0 : index
    %24 = vector.load %arg6[%c1, %c0_17, %c0_18] : memref<9x16x256xf32, #tpu.memory_space<vmem>>, vector<1x16x256xf32>
    %25 = vector.shape_cast %24 : vector<1x16x256xf32> to vector<16x256xf32>
    %26 = arith.mulf %23, %25 : vector<16x256xf32>
    %27 = arith.addf %22, %26 : vector<16x256xf32>
    %c15_i32 = arith.constant 15 : i32
    %28 = tpu.dynamic_rotate %18 by %c15_i32 dim 1 : vector<16x256xf32>, i32 -> vector<16x256xf32>
    %c2 = arith.constant 2 : index
    %c0_19 = arith.constant 0 : index
    %c0_20 = arith.constant 0 : index
    %29 = vector.load %arg6[%c2, %c0_19, %c0_20] : memref<9x16x256xf32, #tpu.memory_space<vmem>>, vector<1x16x256xf32>
    %30 = vector.shape_cast %29 : vector<1x16x256xf32> to vector<16x256xf32>
    %31 = arith.mulf %28, %30 : vector<16x256xf32>
    %32 = arith.addf %27, %31 : vector<16x256xf32>
    %c1_i32 = arith.constant 1 : i32
    %33 = tpu.dynamic_rotate %18 by %c1_i32 dim 1 : vector<16x256xf32>, i32 -> vector<16x256xf32>
    %c3 = arith.constant 3 : index
    %c0_21 = arith.constant 0 : index
    %c0_22 = arith.constant 0 : index
    %34 = vector.load %arg6[%c3, %c0_21, %c0_22] : memref<9x16x256xf32, #tpu.memory_space<vmem>>, vector<1x16x256xf32>
    %35 = vector.shape_cast %34 : vector<1x16x256xf32> to vector<16x256xf32>
    %36 = arith.mulf %33, %35 : vector<16x256xf32>
    %37 = arith.addf %32, %36 : vector<16x256xf32>
    %c4 = arith.constant 4 : index
    %c0_23 = arith.constant 0 : index
    %c0_24 = arith.constant 0 : index
    %38 = vector.load %arg6[%c4, %c0_23, %c0_24] : memref<9x16x256xf32, #tpu.memory_space<vmem>>, vector<1x16x256xf32>
    %39 = vector.shape_cast %38 : vector<1x16x256xf32> to vector<16x256xf32>
    %40 = arith.mulf %18, %39 : vector<16x256xf32>
    %41 = arith.addf %37, %40 : vector<16x256xf32>
    %c255_i32 = arith.constant 255 : i32
    %42 = tpu.dynamic_rotate %18 by %c255_i32 dim 1 : vector<16x256xf32>, i32 -> vector<16x256xf32>
    %c5 = arith.constant 5 : index
    %c0_25 = arith.constant 0 : index
    %c0_26 = arith.constant 0 : index
    %43 = vector.load %arg6[%c5, %c0_25, %c0_26] : memref<9x16x256xf32, #tpu.memory_space<vmem>>, vector<1x16x256xf32>
    %44 = vector.shape_cast %43 : vector<1x16x256xf32> to vector<16x256xf32>
    %45 = arith.mulf %42, %44 : vector<16x256xf32>
    %46 = arith.addf %41, %45 : vector<16x256xf32>
    %c241_i32 = arith.constant 241 : i32
    %47 = tpu.dynamic_rotate %18 by %c241_i32 dim 1 : vector<16x256xf32>, i32 -> vector<16x256xf32>
    %c6 = arith.constant 6 : index
    %c0_27 = arith.constant 0 : index
    %c0_28 = arith.constant 0 : index
    %48 = vector.load %arg6[%c6, %c0_27, %c0_28] : memref<9x16x256xf32, #tpu.memory_space<vmem>>, vector<1x16x256xf32>
    %49 = vector.shape_cast %48 : vector<1x16x256xf32> to vector<16x256xf32>
    %50 = arith.mulf %47, %49 : vector<16x256xf32>
    %51 = arith.addf %46, %50 : vector<16x256xf32>
    %c240_i32 = arith.constant 240 : i32
    %52 = tpu.dynamic_rotate %18 by %c240_i32 dim 1 : vector<16x256xf32>, i32 -> vector<16x256xf32>
    %c7 = arith.constant 7 : index
    %c0_29 = arith.constant 0 : index
    %c0_30 = arith.constant 0 : index
    %53 = vector.load %arg6[%c7, %c0_29, %c0_30] : memref<9x16x256xf32, #tpu.memory_space<vmem>>, vector<1x16x256xf32>
    %54 = vector.shape_cast %53 : vector<1x16x256xf32> to vector<16x256xf32>
    %55 = arith.mulf %52, %54 : vector<16x256xf32>
    %56 = arith.addf %51, %55 : vector<16x256xf32>
    %c239_i32 = arith.constant 239 : i32
    %57 = tpu.dynamic_rotate %18 by %c239_i32 dim 1 : vector<16x256xf32>, i32 -> vector<16x256xf32>
    %c8 = arith.constant 8 : index
    %c0_31 = arith.constant 0 : index
    %c0_32 = arith.constant 0 : index
    %58 = vector.load %arg6[%c8, %c0_31, %c0_32] : memref<9x16x256xf32, #tpu.memory_space<vmem>>, vector<1x16x256xf32>
    %59 = vector.shape_cast %58 : vector<1x16x256xf32> to vector<16x256xf32>
    %60 = arith.mulf %57, %59 : vector<16x256xf32>
    %61 = arith.addf %56, %60 : vector<16x256xf32>
    %c17_i32_33 = arith.constant 17 : i32
    %62 = tpu.dynamic_rotate %61 by %c17_i32_33 dim 1 : vector<16x256xf32>, i32 -> vector<16x256xf32>
    %c0_34 = arith.constant 0 : index
    %c0_35 = arith.constant 0 : index
    %c0_36 = arith.constant 0 : index
    %63 = vector.load %arg6[%c0_34, %c0_35, %c0_36] : memref<9x16x256xf32, #tpu.memory_space<vmem>>, vector<1x16x256xf32>
    %64 = vector.shape_cast %63 : vector<1x16x256xf32> to vector<16x256xf32>
    %65 = arith.mulf %62, %64 : vector<16x256xf32>
    %c16_i32_37 = arith.constant 16 : i32
    %66 = tpu.dynamic_rotate %61 by %c16_i32_37 dim 1 : vector<16x256xf32>, i32 -> vector<16x256xf32>
    %c1_38 = arith.constant 1 : index
    %c0_39 = arith.constant 0 : index
    %c0_40 = arith.constant 0 : index
    %67 = vector.load %arg6[%c1_38, %c0_39, %c0_40] : memref<9x16x256xf32, #tpu.memory_space<vmem>>, vector<1x16x256xf32>
    %68 = vector.shape_cast %67 : vector<1x16x256xf32> to vector<16x256xf32>
    %69 = arith.mulf %66, %68 : vector<16x256xf32>
    %70 = arith.addf %65, %69 : vector<16x256xf32>
    %c15_i32_41 = arith.constant 15 : i32
    %71 = tpu.dynamic_rotate %61 by %c15_i32_41 dim 1 : vector<16x256xf32>, i32 -> vector<16x256xf32>
    %c2_42 = arith.constant 2 : index
    %c0_43 = arith.constant 0 : index
    %c0_44 = arith.constant 0 : index
    %72 = vector.load %arg6[%c2_42, %c0_43, %c0_44] : memref<9x16x256xf32, #tpu.memory_space<vmem>>, vector<1x16x256xf32>
    %73 = vector.shape_cast %72 : vector<1x16x256xf32> to vector<16x256xf32>
    %74 = arith.mulf %71, %73 : vector<16x256xf32>
    %75 = arith.addf %70, %74 : vector<16x256xf32>
    %c1_i32_45 = arith.constant 1 : i32
    %76 = tpu.dynamic_rotate %61 by %c1_i32_45 dim 1 : vector<16x256xf32>, i32 -> vector<16x256xf32>
    %c3_46 = arith.constant 3 : index
    %c0_47 = arith.constant 0 : index
    %c0_48 = arith.constant 0 : index
    %77 = vector.load %arg6[%c3_46, %c0_47, %c0_48] : memref<9x16x256xf32, #tpu.memory_space<vmem>>, vector<1x16x256xf32>
    %78 = vector.shape_cast %77 : vector<1x16x256xf32> to vector<16x256xf32>
    %79 = arith.mulf %76, %78 : vector<16x256xf32>
    %80 = arith.addf %75, %79 : vector<16x256xf32>
    %c4_49 = arith.constant 4 : index
    %c0_50 = arith.constant 0 : index
    %c0_51 = arith.constant 0 : index
    %81 = vector.load %arg6[%c4_49, %c0_50, %c0_51] : memref<9x16x256xf32, #tpu.memory_space<vmem>>, vector<1x16x256xf32>
    %82 = vector.shape_cast %81 : vector<1x16x256xf32> to vector<16x256xf32>
    %83 = arith.mulf %61, %82 : vector<16x256xf32>
    %84 = arith.addf %80, %83 : vector<16x256xf32>
    %c255_i32_52 = arith.constant 255 : i32
    %85 = tpu.dynamic_rotate %61 by %c255_i32_52 dim 1 : vector<16x256xf32>, i32 -> vector<16x256xf32>
    %c5_53 = arith.constant 5 : index
    %c0_54 = arith.constant 0 : index
    %c0_55 = arith.constant 0 : index
    %86 = vector.load %arg6[%c5_53, %c0_54, %c0_55] : memref<9x16x256xf32, #tpu.memory_space<vmem>>, vector<1x16x256xf32>
    %87 = vector.shape_cast %86 : vector<1x16x256xf32> to vector<16x256xf32>
    %88 = arith.mulf %85, %87 : vector<16x256xf32>
    %89 = arith.addf %84, %88 : vector<16x256xf32>
    %c241_i32_56 = arith.constant 241 : i32
    %90 = tpu.dynamic_rotate %61 by %c241_i32_56 dim 1 : vector<16x256xf32>, i32 -> vector<16x256xf32>
    %c6_57 = arith.constant 6 : index
    %c0_58 = arith.constant 0 : index
    %c0_59 = arith.constant 0 : index
    %91 = vector.load %arg6[%c6_57, %c0_58, %c0_59] : memref<9x16x256xf32, #tpu.memory_space<vmem>>, vector<1x16x256xf32>
    %92 = vector.shape_cast %91 : vector<1x16x256xf32> to vector<16x256xf32>
    %93 = arith.mulf %90, %92 : vector<16x256xf32>
    %94 = arith.addf %89, %93 : vector<16x256xf32>
    %c240_i32_60 = arith.constant 240 : i32
    %95 = tpu.dynamic_rotate %61 by %c240_i32_60 dim 1 : vector<16x256xf32>, i32 -> vector<16x256xf32>
    %c7_61 = arith.constant 7 : index
    %c0_62 = arith.constant 0 : index
    %c0_63 = arith.constant 0 : index
    %96 = vector.load %arg6[%c7_61, %c0_62, %c0_63] : memref<9x16x256xf32, #tpu.memory_space<vmem>>, vector<1x16x256xf32>
    %97 = vector.shape_cast %96 : vector<1x16x256xf32> to vector<16x256xf32>
    %98 = arith.mulf %95, %97 : vector<16x256xf32>
    %99 = arith.addf %94, %98 : vector<16x256xf32>
    %c239_i32_64 = arith.constant 239 : i32
    %100 = tpu.dynamic_rotate %61 by %c239_i32_64 dim 1 : vector<16x256xf32>, i32 -> vector<16x256xf32>
    %c8_65 = arith.constant 8 : index
    %c0_66 = arith.constant 0 : index
    %c0_67 = arith.constant 0 : index
    %101 = vector.load %arg6[%c8_65, %c0_66, %c0_67] : memref<9x16x256xf32, #tpu.memory_space<vmem>>, vector<1x16x256xf32>
    %102 = vector.shape_cast %101 : vector<1x16x256xf32> to vector<16x256xf32>
    %103 = arith.mulf %100, %102 : vector<16x256xf32>
    %104 = arith.addf %99, %103 : vector<16x256xf32>
    %105 = arith.addf %61, %104 : vector<16x256xf32>
    %106 = arith.truncf %105 : vector<16x256xf32> to vector<16x256xbf16>
    %cst_68 = arith.constant dense<0.000000e+00> : vector<4x256xf32>
    %107 = tpu.matmul %4, %106, %cst_68 {dimension_numbers = #tpu.dot_dimension_numbers<[1], [0], [0], [1], [0, 0, 1, 1], [], []>} : vector<4x16xbf16>, vector<16x256xbf16>, vector<4x256xf32> -> vector<4x256xf32>
    %c0_69 = arith.constant 0 : index
    %c0_70 = arith.constant 0 : index
    %c0_71 = arith.constant 0 : index
    %108 = vector.load %arg8[%c0_69, %c0_70, %c0_71] : memref<2x4x256xf32, #tpu.memory_space<vmem>>, vector<1x4x256xf32>
    %109 = vector.shape_cast %108 : vector<1x4x256xf32> to vector<4x256xf32>
    %110 = vector.shape_cast %107 : vector<4x256xf32> to vector<1x4x256xf32>
    tpu.vector_store %arg8[%c0_69, %c0_70, %c0_71], %110 {strides = array<i32>} : memref<2x4x256xf32, #tpu.memory_space<vmem>>, vector<1x4x256xf32>,
    %c1_72 = arith.constant 1 : index
    %c0_73 = arith.constant 0 : index
    %c0_74 = arith.constant 0 : index
    %111 = vector.load %arg1[%c1_72, %c0_73, %c0_74] : memref<2x8x256xf32, #tpu.memory_space<vmem>>, vector<1x8x256xf32>
    %112 = vector.shape_cast %111 : vector<1x8x256xf32> to vector<8x256xf32>
    %113 = vector.broadcast %0 : vector<8x1xf32> to vector<8x256xf32>
    %114 = arith.mulf %112, %113 : vector<8x256xf32>
    %115 = vector.broadcast %1 : vector<8x1xf32> to vector<8x256xf32>
    %116 = arith.addf %114, %115 : vector<8x256xf32>
    %cst_75 = arith.constant 0.000000e+00 : f32
    %117 = vector.broadcast %cst_75 : f32 to vector<8x256xf32>
    %118 = arith.maximumf %116, %117 : vector<8x256xf32>
    %119 = arith.truncf %118 : vector<8x256xf32> to vector<8x256xbf16>
    %cst_76 = arith.constant dense<0.000000e+00> : vector<16x256xf32>
    %120 = tpu.matmul %2, %119, %cst_76 {dimension_numbers = #tpu.dot_dimension_numbers<[1], [0], [0], [1], [0, 0, 1, 1], [], []>} : vector<16x8xbf16>, vector<8x256xbf16>, vector<16x256xf32> -> vector<16x256xf32>
    %121 = vector.broadcast %3 : vector<16x1xf32> to vector<16x256xf32>
    %122 = arith.addf %120, %121 : vector<16x256xf32>
    %cst_77 = arith.constant 0.000000e+00 : f32
    %123 = vector.broadcast %cst_77 : f32 to vector<16x256xf32>
    %124 = arith.maximumf %122, %123 : vector<16x256xf32>
    %c17_i32_78 = arith.constant 17 : i32
    %125 = tpu.dynamic_rotate %124 by %c17_i32_78 dim 1 : vector<16x256xf32>, i32 -> vector<16x256xf32>
    %c0_79 = arith.constant 0 : index
    %c0_80 = arith.constant 0 : index
    %c0_81 = arith.constant 0 : index
    %126 = vector.load %arg6[%c0_79, %c0_80, %c0_81] : memref<9x16x256xf32, #tpu.memory_space<vmem>>, vector<1x16x256xf32>
    %127 = vector.shape_cast %126 : vector<1x16x256xf32> to vector<16x256xf32>
    %128 = arith.mulf %125, %127 : vector<16x256xf32>
    %c16_i32_82 = arith.constant 16 : i32
    %129 = tpu.dynamic_rotate %124 by %c16_i32_82 dim 1 : vector<16x256xf32>, i32 -> vector<16x256xf32>
    %c1_83 = arith.constant 1 : index
    %c0_84 = arith.constant 0 : index
    %c0_85 = arith.constant 0 : index
    %130 = vector.load %arg6[%c1_83, %c0_84, %c0_85] : memref<9x16x256xf32, #tpu.memory_space<vmem>>, vector<1x16x256xf32>
    %131 = vector.shape_cast %130 : vector<1x16x256xf32> to vector<16x256xf32>
    %132 = arith.mulf %129, %131 : vector<16x256xf32>
    %133 = arith.addf %128, %132 : vector<16x256xf32>
    %c15_i32_86 = arith.constant 15 : i32
    %134 = tpu.dynamic_rotate %124 by %c15_i32_86 dim 1 : vector<16x256xf32>, i32 -> vector<16x256xf32>
    %c2_87 = arith.constant 2 : index
    %c0_88 = arith.constant 0 : index
    %c0_89 = arith.constant 0 : index
    %135 = vector.load %arg6[%c2_87, %c0_88, %c0_89] : memref<9x16x256xf32, #tpu.memory_space<vmem>>, vector<1x16x256xf32>
    %136 = vector.shape_cast %135 : vector<1x16x256xf32> to vector<16x256xf32>
    %137 = arith.mulf %134, %136 : vector<16x256xf32>
    %138 = arith.addf %133, %137 : vector<16x256xf32>
    %c1_i32_90 = arith.constant 1 : i32
    %139 = tpu.dynamic_rotate %124 by %c1_i32_90 dim 1 : vector<16x256xf32>, i32 -> vector<16x256xf32>
    %c3_91 = arith.constant 3 : index
    %c0_92 = arith.constant 0 : index
    %c0_93 = arith.constant 0 : index
    %140 = vector.load %arg6[%c3_91, %c0_92, %c0_93] : memref<9x16x256xf32, #tpu.memory_space<vmem>>, vector<1x16x256xf32>
    %141 = vector.shape_cast %140 : vector<1x16x256xf32> to vector<16x256xf32>
    %142 = arith.mulf %139, %141 : vector<16x256xf32>
    %143 = arith.addf %138, %142 : vector<16x256xf32>
    %c4_94 = arith.constant 4 : index
    %c0_95 = arith.constant 0 : index
    %c0_96 = arith.constant 0 : index
    %144 = vector.load %arg6[%c4_94, %c0_95, %c0_96] : memref<9x16x256xf32, #tpu.memory_space<vmem>>, vector<1x16x256xf32>
    %145 = vector.shape_cast %144 : vector<1x16x256xf32> to vector<16x256xf32>
    %146 = arith.mulf %124, %145 : vector<16x256xf32>
    %147 = arith.addf %143, %146 : vector<16x256xf32>
    %c255_i32_97 = arith.constant 255 : i32
    %148 = tpu.dynamic_rotate %124 by %c255_i32_97 dim 1 : vector<16x256xf32>, i32 -> vector<16x256xf32>
    %c5_98 = arith.constant 5 : index
    %c0_99 = arith.constant 0 : index
    %c0_100 = arith.constant 0 : index
    %149 = vector.load %arg6[%c5_98, %c0_99, %c0_100] : memref<9x16x256xf32, #tpu.memory_space<vmem>>, vector<1x16x256xf32>
    %150 = vector.shape_cast %149 : vector<1x16x256xf32> to vector<16x256xf32>
    %151 = arith.mulf %148, %150 : vector<16x256xf32>
    %152 = arith.addf %147, %151 : vector<16x256xf32>
    %c241_i32_101 = arith.constant 241 : i32
    %153 = tpu.dynamic_rotate %124 by %c241_i32_101 dim 1 : vector<16x256xf32>, i32 -> vector<16x256xf32>
    %c6_102 = arith.constant 6 : index
    %c0_103 = arith.constant 0 : index
    %c0_104 = arith.constant 0 : index
    %154 = vector.load %arg6[%c6_102, %c0_103, %c0_104] : memref<9x16x256xf32, #tpu.memory_space<vmem>>, vector<1x16x256xf32>
    %155 = vector.shape_cast %154 : vector<1x16x256xf32> to vector<16x256xf32>
    %156 = arith.mulf %153, %155 : vector<16x256xf32>
    %157 = arith.addf %152, %156 : vector<16x256xf32>
    %c240_i32_105 = arith.constant 240 : i32
    %158 = tpu.dynamic_rotate %124 by %c240_i32_105 dim 1 : vector<16x256xf32>, i32 -> vector<16x256xf32>
    %c7_106 = arith.constant 7 : index
    %c0_107 = arith.constant 0 : index
    %c0_108 = arith.constant 0 : index
    %159 = vector.load %arg6[%c7_106, %c0_107, %c0_108] : memref<9x16x256xf32, #tpu.memory_space<vmem>>, vector<1x16x256xf32>
    %160 = vector.shape_cast %159 : vector<1x16x256xf32> to vector<16x256xf32>
    %161 = arith.mulf %158, %160 : vector<16x256xf32>
    %162 = arith.addf %157, %161 : vector<16x256xf32>
    %c239_i32_109 = arith.constant 239 : i32
    %163 = tpu.dynamic_rotate %124 by %c239_i32_109 dim 1 : vector<16x256xf32>, i32 -> vector<16x256xf32>
    %c8_110 = arith.constant 8 : index
    %c0_111 = arith.constant 0 : index
    %c0_112 = arith.constant 0 : index
    %164 = vector.load %arg6[%c8_110, %c0_111, %c0_112] : memref<9x16x256xf32, #tpu.memory_space<vmem>>, vector<1x16x256xf32>
    %165 = vector.shape_cast %164 : vector<1x16x256xf32> to vector<16x256xf32>
    %166 = arith.mulf %163, %165 : vector<16x256xf32>
    %167 = arith.addf %162, %166 : vector<16x256xf32>
    %c17_i32_113 = arith.constant 17 : i32
    %168 = tpu.dynamic_rotate %167 by %c17_i32_113 dim 1 : vector<16x256xf32>, i32 -> vector<16x256xf32>
    %c0_114 = arith.constant 0 : index
    %c0_115 = arith.constant 0 : index
    %c0_116 = arith.constant 0 : index
    %169 = vector.load %arg6[%c0_114, %c0_115, %c0_116] : memref<9x16x256xf32, #tpu.memory_space<vmem>>, vector<1x16x256xf32>
    %170 = vector.shape_cast %169 : vector<1x16x256xf32> to vector<16x256xf32>
    %171 = arith.mulf %168, %170 : vector<16x256xf32>
    %c16_i32_117 = arith.constant 16 : i32
    %172 = tpu.dynamic_rotate %167 by %c16_i32_117 dim 1 : vector<16x256xf32>, i32 -> vector<16x256xf32>
    %c1_118 = arith.constant 1 : index
    %c0_119 = arith.constant 0 : index
    %c0_120 = arith.constant 0 : index
    %173 = vector.load %arg6[%c1_118, %c0_119, %c0_120] : memref<9x16x256xf32, #tpu.memory_space<vmem>>, vector<1x16x256xf32>
    %174 = vector.shape_cast %173 : vector<1x16x256xf32> to vector<16x256xf32>
    %175 = arith.mulf %172, %174 : vector<16x256xf32>
    %176 = arith.addf %171, %175 : vector<16x256xf32>
    %c15_i32_121 = arith.constant 15 : i32
    %177 = tpu.dynamic_rotate %167 by %c15_i32_121 dim 1 : vector<16x256xf32>, i32 -> vector<16x256xf32>
    %c2_122 = arith.constant 2 : index
    %c0_123 = arith.constant 0 : index
    %c0_124 = arith.constant 0 : index
    %178 = vector.load %arg6[%c2_122, %c0_123, %c0_124] : memref<9x16x256xf32, #tpu.memory_space<vmem>>, vector<1x16x256xf32>
    %179 = vector.shape_cast %178 : vector<1x16x256xf32> to vector<16x256xf32>
    %180 = arith.mulf %177, %179 : vector<16x256xf32>
    %181 = arith.addf %176, %180 : vector<16x256xf32>
    %c1_i32_125 = arith.constant 1 : i32
    %182 = tpu.dynamic_rotate %167 by %c1_i32_125 dim 1 : vector<16x256xf32>, i32 -> vector<16x256xf32>
    %c3_126 = arith.constant 3 : index
    %c0_127 = arith.constant 0 : index
    %c0_128 = arith.constant 0 : index
    %183 = vector.load %arg6[%c3_126, %c0_127, %c0_128] : memref<9x16x256xf32, #tpu.memory_space<vmem>>, vector<1x16x256xf32>
    %184 = vector.shape_cast %183 : vector<1x16x256xf32> to vector<16x256xf32>
    %185 = arith.mulf %182, %184 : vector<16x256xf32>
    %186 = arith.addf %181, %185 : vector<16x256xf32>
    %c4_129 = arith.constant 4 : index
    %c0_130 = arith.constant 0 : index
    %c0_131 = arith.constant 0 : index
    %187 = vector.load %arg6[%c4_129, %c0_130, %c0_131] : memref<9x16x256xf32, #tpu.memory_space<vmem>>, vector<1x16x256xf32>
    %188 = vector.shape_cast %187 : vector<1x16x256xf32> to vector<16x256xf32>
    %189 = arith.mulf %167, %188 : vector<16x256xf32>
    %190 = arith.addf %186, %189 : vector<16x256xf32>
    %c255_i32_132 = arith.constant 255 : i32
    %191 = tpu.dynamic_rotate %167 by %c255_i32_132 dim 1 : vector<16x256xf32>, i32 -> vector<16x256xf32>
    %c5_133 = arith.constant 5 : index
    %c0_134 = arith.constant 0 : index
    %c0_135 = arith.constant 0 : index
    %192 = vector.load %arg6[%c5_133, %c0_134, %c0_135] : memref<9x16x256xf32, #tpu.memory_space<vmem>>, vector<1x16x256xf32>
    %193 = vector.shape_cast %192 : vector<1x16x256xf32> to vector<16x256xf32>
    %194 = arith.mulf %191, %193 : vector<16x256xf32>
    %195 = arith.addf %190, %194 : vector<16x256xf32>
    %c241_i32_136 = arith.constant 241 : i32
    %196 = tpu.dynamic_rotate %167 by %c241_i32_136 dim 1 : vector<16x256xf32>, i32 -> vector<16x256xf32>
    %c6_137 = arith.constant 6 : index
    %c0_138 = arith.constant 0 : index
    %c0_139 = arith.constant 0 : index
    %197 = vector.load %arg6[%c6_137, %c0_138, %c0_139] : memref<9x16x256xf32, #tpu.memory_space<vmem>>, vector<1x16x256xf32>
    %198 = vector.shape_cast %197 : vector<1x16x256xf32> to vector<16x256xf32>
    %199 = arith.mulf %196, %198 : vector<16x256xf32>
    %200 = arith.addf %195, %199 : vector<16x256xf32>
    %c240_i32_140 = arith.constant 240 : i32
    %201 = tpu.dynamic_rotate %167 by %c240_i32_140 dim 1 : vector<16x256xf32>, i32 -> vector<16x256xf32>
    %c7_141 = arith.constant 7 : index
    %c0_142 = arith.constant 0 : index
    %c0_143 = arith.constant 0 : index
    %202 = vector.load %arg6[%c7_141, %c0_142, %c0_143] : memref<9x16x256xf32, #tpu.memory_space<vmem>>, vector<1x16x256xf32>
    %203 = vector.shape_cast %202 : vector<1x16x256xf32> to vector<16x256xf32>
    %204 = arith.mulf %201, %203 : vector<16x256xf32>
    %205 = arith.addf %200, %204 : vector<16x256xf32>
    %c239_i32_144 = arith.constant 239 : i32
    %206 = tpu.dynamic_rotate %167 by %c239_i32_144 dim 1 : vector<16x256xf32>, i32 -> vector<16x256xf32>
    %c8_145 = arith.constant 8 : index
    %c0_146 = arith.constant 0 : index
    %c0_147 = arith.constant 0 : index
    %207 = vector.load %arg6[%c8_145, %c0_146, %c0_147] : memref<9x16x256xf32, #tpu.memory_space<vmem>>, vector<1x16x256xf32>
    %208 = vector.shape_cast %207 : vector<1x16x256xf32> to vector<16x256xf32>
    %209 = arith.mulf %206, %208 : vector<16x256xf32>
    %210 = arith.addf %205, %209 : vector<16x256xf32>
    %211 = arith.addf %167, %210 : vector<16x256xf32>
    %212 = arith.truncf %211 : vector<16x256xf32> to vector<16x256xbf16>
    %cst_148 = arith.constant dense<0.000000e+00> : vector<4x256xf32>
    %213 = tpu.matmul %4, %212, %cst_148 {dimension_numbers = #tpu.dot_dimension_numbers<[1], [0], [0], [1], [0, 0, 1, 1], [], []>} : vector<4x16xbf16>, vector<16x256xbf16>, vector<4x256xf32> -> vector<4x256xf32>
    %c1_149 = arith.constant 1 : index
    %c0_150 = arith.constant 0 : index
    %c0_151 = arith.constant 0 : index
    %214 = vector.load %arg8[%c1_149, %c0_150, %c0_151] : memref<2x4x256xf32, #tpu.memory_space<vmem>>, vector<1x4x256xf32>
    %215 = vector.shape_cast %214 : vector<1x4x256xf32> to vector<4x256xf32>
    %216 = vector.shape_cast %213 : vector<4x256xf32> to vector<1x4x256xf32>
    tpu.vector_store %arg8[%c1_149, %c0_150, %c0_151], %216 {strides = array<i32>} : memref<2x4x256xf32, #tpu.memory_space<vmem>>, vector<1x4x256xf32>,
    return
  }
  func.func @transform_0(%arg0: i32) -> (i32, i32, i32) {
    %c0_i32 = arith.constant 0 : i32
    %c0_i32_0 = arith.constant 0 : i32
    %c0_i32_1 = arith.constant 0 : i32
    return %arg0, %c0_i32, %c0_i32_0 : i32, i32, i32
  }
  func.func @transform_1(%arg0: i32) -> (i32, i32) {
    %c0_i32 = arith.constant 0 : i32
    %c0_i32_0 = arith.constant 0 : i32
    %c0_i32_1 = arith.constant 0 : i32
    return %c0_i32, %c0_i32_0 : i32, i32
  }
  func.func @transform_2(%arg0: i32) -> (i32, i32) {
    %c0_i32 = arith.constant 0 : i32
    %c0_i32_0 = arith.constant 0 : i32
    %c0_i32_1 = arith.constant 0 : i32
    return %c0_i32, %c0_i32_0 : i32, i32
  }
  func.func @transform_3(%arg0: i32) -> (i32, i32) {
    %c0_i32 = arith.constant 0 : i32
    %c0_i32_0 = arith.constant 0 : i32
    %c0_i32_1 = arith.constant 0 : i32
    return %c0_i32, %c0_i32_0 : i32, i32
  }
  func.func @transform_4(%arg0: i32) -> (i32, i32) {
    %c0_i32 = arith.constant 0 : i32
    %c0_i32_0 = arith.constant 0 : i32
    %c0_i32_1 = arith.constant 0 : i32
    return %c0_i32, %c0_i32_0 : i32, i32
  }
  func.func @transform_5(%arg0: i32) -> (i32, i32, i32) {
    %c0_i32 = arith.constant 0 : i32
    %c0_i32_0 = arith.constant 0 : i32
    %c0_i32_1 = arith.constant 0 : i32
    %c0_i32_2 = arith.constant 0 : i32
    return %c0_i32, %c0_i32_0, %c0_i32_1 : i32, i32, i32
  }
  func.func @transform_6(%arg0: i32) -> (i32, i32) {
    %c0_i32 = arith.constant 0 : i32
    %c0_i32_0 = arith.constant 0 : i32
    %c0_i32_1 = arith.constant 0 : i32
    return %c0_i32, %c0_i32_0 : i32, i32
  }
  func.func @transform_7(%arg0: i32) -> (i32, i32, i32) {
    %c0_i32 = arith.constant 0 : i32
    %c0_i32_0 = arith.constant 0 : i32
    %c0_i32_1 = arith.constant 0 : i32
    return %arg0, %c0_i32, %c0_i32_0 : i32, i32, i32
  }
}

</mosaic_0001>

<llo_original>
// kernel: tpu_custom_call.1
$region0: #{tpu_custom_call.1}
  #allocation0 [shape = 'u32[]', space=smem, size = 0x4, offset = 0x4, fixed_abs, tag = 'smem constant byte address 0x4 - core index']
  #allocation1 [shape = 'u32[72,128]{1,0:T(1,128)}', space=vmem, size = 0x9000, scoped, tag = 'internal scratch']
  %s0 = inlined_call_operand.hbm [shape: f32[4,8,256], index: 0, kind: input, shape index: {}]
  %s1 = inlined_call_operand.vmem [shape: f32[8,1], index: 1, kind: input, shape index: {}]
  %s2 = inlined_call_operand.vmem [shape: f32[8,1], index: 2, kind: input, shape index: {}]
  %s3 = inlined_call_operand.vmem [shape: bf16[16,8], index: 3, kind: input, shape index: {}]
  %s4 = inlined_call_operand.vmem [shape: f32[16,1], index: 4, kind: input, shape index: {}]
  %s5 = inlined_call_operand.hbm [shape: f32[9,16,256], index: 5, kind: input, shape index: {}]
  %s6 = inlined_call_operand.vmem [shape: bf16[4,16], index: 6, kind: input, shape index: {}]
  %s7 = inlined_call_operand.hbm [shape: f32[4,4,256], index: 7, kind: output, shape index: {}]
  %s8 = sld [smem:[#allocation0]]
  $region69: #{tpu_custom_call.1} parent=0
    _
  %s10 = ssub.s32 1, %s8
  %s11 = scalar_select 0, %s10, %s8
  $region1: #{tpu_custom_call.1} parent=0
    #allocation2 [shape = 'u8[32768]{0}', space=vmem, size = 0x8000, scoped, tag = 'input window, operand 0']
    #allocation3 [shape = 's32[2]{0}', space=sflag, size = 0x8, scoped, tag = 'scoped memory for tpu_custom_call.1']
    #allocation4 [shape = 's32[2]{0}', space=sflag, size = 0x8, scoped, tag = 'scoped memory for tpu_custom_call.1']
    #allocation5 [shape = 'u8[147456]{0}', space=vmem, size = 0x24000, scoped, tag = 'input window, operand 5, single buffered']
    #allocation6 [shape = 's32[1]{0}', space=sflag, size = 0x4, scoped, tag = 'scoped memory for tpu_custom_call.1']
    #allocation7 [shape = 'u8[16384]{0}', space=vmem, size = 0x4000, scoped, tag = 'output window, operand 0']
    %12 = vsyncpa [#allocation3], 0
    %s13 = scalar_lea.sflag [#allocation3], 1
    %14 = vsyncpa %s13, 0
    %15 = vsyncpa [#allocation6], 0
    %16 = vsyncpa [#allocation4], 0
    %s17 = scalar_lea.sflag [#allocation4], 1
    %18 = vsyncpa %s17, 0
    loop: start=0, step=1, limit=4
    $region2: #{tpu_custom_call.1} parent=1 // loop_pre_header
      _
    $region3: #{tpu_custom_call.1} parent=1 // loop_header
      %s20 = sphi 0, %s24
      %p21 = scmp.ge.s32.totalorder %s20, 4
      %s30 = sphi 0, %s32
      %s33 = sphi 0, %s30
      %s34 = sphi 0, %s33
      %s50 = sphi 0, %s34
      %s54 = sphi 0, %s54
      %s56 = sphi 0, %s54
      %s57 = sphi 0, %s56
      %s71 = sphi 0, %s57
      %s75 = sphi 0, %s75
      %s77 = sphi 0, %s75
      %s78 = sphi 0, %s77
      %s92 = sphi 0, %s78
      %s96 = sphi 0, %s96
      %s98 = sphi 0, %s96
      %s99 = sphi 0, %s98
      %s113 = sphi 0, %s99
      %s117 = sphi 0, %s117
      %s119 = sphi 0, %s117
      %s120 = sphi 0, %s119
      %s134 = sphi 0, %s120
      %s138 = sphi 0, %s138
      %s140 = sphi 0, %s138
      %s141 = sphi 0, %s140
      %s155 = sphi 0, %s141
      %s159 = sphi 0, %s159
      %s161 = sphi 0, %s159
      %s162 = sphi 0, %s161
      %s176 = sphi 0, %s162
      %s182 = sphi 0, %s184
      %s185 = sphi 0, %s182
      %s186 = sphi 0, %s185
      %s202 = sphi 0, %s186
    $region4: #{tpu_custom_call.1} parent=1 // loop_header_branch
      %23 = sbr.rel (%p21) target = $region8
    $region5: #{tpu_custom_call.1} parent=1 // loop_body
      %s25 = ssub.s32 %s20, 1
      %s26 = ssub.s32 %s20, 2
      %s27 = sadd.s32 %s20, 1
      %s28 = ssub.s32 %s20, %s27
      %p29 = scmp.eq.s32.totalorder %s28, 0
      %s31 = sadd.s32 %s30, 1
      %s32 = scalar_select %p29, %s30, %s31
      %p35 = pneg %p29
      %p36 = scmp.eq.s32.totalorder %s20, 1
      %p37 = por %p35, %p36
      %p38 = scmp.ne.s32.totalorder %s30, %s33
      %p39 = scmp.eq.s32.totalorder %s20, 0
      %p40 = por %p38, %p39
      %p41 = scmp.ne.s32.totalorder %s30, %s33
      %p42 = scmp.eq.s32.totalorder %s25, 1
      %p43 = por %p41, %p42
      %p44 = scmp.ne.s32.totalorder %s33, %s34
      %p45 = scmp.eq.s32.totalorder %s25, 0
      %p46 = por %p44, %p45
      %p47 = scmp.ne.s32.totalorder %s33, %s34
      %p48 = scmp.eq.s32.totalorder %s26, 1
      %p49 = por %p47, %p48
      %p51 = scmp.ne.s32.totalorder %s34, %s50
      %p52 = scmp.eq.s32.totalorder %s26, 0
      %p53 = por %p51, %p52
      %s55 = sadd.s32 %s54, 1
      %p58 = scmp.eq.s32.totalorder %s20, 1
      %p59 = scmp.ne.s32.totalorder %s54, %s56
      %p60 = scmp.eq.s32.totalorder %s20, 0
      %p61 = por %p59, %p60
      %p62 = scmp.ne.s32.totalorder %s54, %s56
      %p63 = scmp.eq.s32.totalorder %s25, 1
      %p64 = por %p62, %p63
      %p65 = scmp.ne.s32.totalorder %s56, %s57
      %p66 = scmp.eq.s32.totalorder %s25, 0
      %p67 = por %p65, %p66
      %p68 = scmp.ne.s32.totalorder %s56, %s57
      %p69 = scmp.eq.s32.totalorder %s26, 1
      %p70 = por %p68, %p69
      %p72 = scmp.ne.s32.totalorder %s57, %s71
      %p73 = scmp.eq.s32.totalorder %s26, 0
      %p74 = por %p72, %p73
      %s76 = sadd.s32 %s75, 1
      %p79 = scmp.eq.s32.totalorder %s20, 1
      %p80 = scmp.ne.s32.totalorder %s75, %s77
      %p81 = scmp.eq.s32.totalorder %s20, 0
      %p82 = por %p80, %p81
      %p83 = scmp.ne.s32.totalorder %s75, %s77
      %p84 = scmp.eq.s32.totalorder %s25, 1
      %p85 = por %p83, %p84
      %p86 = scmp.ne.s32.totalorder %s77, %s78
      %p87 = scmp.eq.s32.totalorder %s25, 0
      %p88 = por %p86, %p87
      %p89 = scmp.ne.s32.totalorder %s77, %s78
      %p90 = scmp.eq.s32.totalorder %s26, 1
      %p91 = por %p89, %p90
      %p93 = scmp.ne.s32.totalorder %s78, %s92
      %p94 = scmp.eq.s32.totalorder %s26, 0
      %p95 = por %p93, %p94
      %s97 = sadd.s32 %s96, 1
      %p100 = scmp.eq.s32.totalorder %s20, 1
      %p101 = scmp.ne.s32.totalorder %s96, %s98
      %p102 = scmp.eq.s32.totalorder %s20, 0
      %p103 = por %p101, %p102
      %p104 = scmp.ne.s32.totalorder %s96, %s98
      %p105 = scmp.eq.s32.totalorder %s25, 1
      %p106 = por %p104, %p105
      %p107 = scmp.ne.s32.totalorder %s98, %s99
      %p108 = scmp.eq.s32.totalorder %s25, 0
      %p109 = por %p107, %p108
      %p110 = scmp.ne.s32.totalorder %s98, %s99
      %p111 = scmp.eq.s32.totalorder %s26, 1
      %p112 = por %p110, %p111
      %p114 = scmp.ne.s32.totalorder %s99, %s113
      %p115 = scmp.eq.s32.totalorder %s26, 0
      %p116 = por %p114, %p115
      %s118 = sadd.s32 %s117, 1
      %p121 = scmp.eq.s32.totalorder %s20, 1
      %p122 = scmp.ne.s32.totalorder %s117, %s119
      %p123 = scmp.eq.s32.totalorder %s20, 0
      %p124 = por %p122, %p123
      %p125 = scmp.ne.s32.totalorder %s117, %s119
      %p126 = scmp.eq.s32.totalorder %s25, 1
      %p127 = por %p125, %p126
      %p128 = scmp.ne.s32.totalorder %s119, %s120
      %p129 = scmp.eq.s32.totalorder %s25, 0
      %p130 = por %p128, %p129
      %p131 = scmp.ne.s32.totalorder %s119, %s120
      %p132 = scmp.eq.s32.totalorder %s26, 1
      %p133 = por %p131, %p132
      %p135 = scmp.ne.s32.totalorder %s120, %s134
      %p136 = scmp.eq.s32.totalorder %s26, 0
      %p137 = por %p135, %p136
      %s139 = sadd.s32 %s138, 1
      %p142 = scmp.eq.s32.totalorder %s20, 1
      %p143 = scmp.ne.s32.totalorder %s138, %s140
      %p144 = scmp.eq.s32.totalorder %s20, 0
      %p145 = por %p143, %p144
      %p146 = scmp.ne.s32.totalorder %s138, %s140
      %p147 = scmp.eq.s32.totalorder %s25, 1
      %p148 = por %p146, %p147
      %p149 = scmp.ne.s32.totalorder %s140, %s141
      %p150 = scmp.eq.s32.totalorder %s25, 0
      %p151 = por %p149, %p150
      %p152 = scmp.ne.s32.totalorder %s140, %s141
      %p153 = scmp.eq.s32.totalorder %s26, 1
      %p154 = por %p152, %p153
      %p156 = scmp.ne.s32.totalorder %s141, %s155
      %p157 = scmp.eq.s32.totalorder %s26, 0
      %p158 = por %p156, %p157
      %s160 = sadd.s32 %s159, 1
      %p163 = scmp.eq.s32.totalorder %s20, 1
      %p164 = scmp.ne.s32.totalorder %s159, %s161
      %p165 = scmp.eq.s32.totalorder %s20, 0
      %p166 = por %p164, %p165
      %p167 = scmp.ne.s32.totalorder %s159, %s161
      %p168 = scmp.eq.s32.totalorder %s25, 1
      %p169 = por %p167, %p168
      %p170 = scmp.ne.s32.totalorder %s161, %s162
      %p171 = scmp.eq.s32.totalorder %s25, 0
      %p172 = por %p170, %p171
      %p173 = scmp.ne.s32.totalorder %s161, %s162
      %p174 = scmp.eq.s32.totalorder %s26, 1
      %p175 = por %p173, %p174
      %p177 = scmp.ne.s32.totalorder %s162, %s176
      %p178 = scmp.eq.s32.totalorder %s26, 0
      %p179 = por %p177, %p178
      %s180 = ssub.s32 %s20, %s27
      %p181 = scmp.eq.s32.totalorder %s180, 0
      %s183 = sadd.s32 %s182, 1
      %s184 = scalar_select %p181, %s182, %s183
      %p187 = pneg %p181
      %p188 = scmp.eq.s32.totalorder %s20, 1
      %p189 = por %p187, %p188
      %p190 = scmp.ne.s32.totalorder %s182, %s185
      %p191 = scmp.eq.s32.totalorder %s20, 0
      %p192 = por %p190, %p191
      %p193 = scmp.ne.s32.totalorder %s182, %s185
      %p194 = scmp.eq.s32.totalorder %s25, 1
      %p195 = por %p193, %p194
      %p196 = scmp.ne.s32.totalorder %s185, %s186
      %p197 = scmp.eq.s32.totalorder %s25, 0
      %p198 = por %p196, %p197
      %p199 = scmp.ne.s32.totalorder %s185, %s186
      %p200 = scmp.eq.s32.totalorder %s26, 1
      %p201 = por %p199, %p200
      %p203 = scmp.ne.s32.totalorder %s186, %s202
      %p204 = scmp.eq.s32.totalorder %s26, 0
      %p205 = por %p203, %p204
      %p206 = scmp.le.s32.totalorder 1, %s20
      %p207 = scmp.lt.s32.totalorder %s20, 3
      %p208 = pnand %p206, %p207
      %p209 = pneg %p208
      // Predicated region
      $region9: #{tpu_custom_call.1} parent=5 // pred_check
        _
      $region10: #{tpu_custom_call.1} parent=5 // pred_check_branch
        %211 = sbr.rel (%p208) target = $region12
      $region11: #{tpu_custom_call.1} parent=5 // pred_region
        %s212 = ssub.s32 %s20, 1
        // Predicated region
        $region13: #{tpu_custom_call.1} parent=11 // pred_check
          %p213 = pneg %p67
        $region14: #{tpu_custom_call.1} parent=11 // pred_check_branch
          %215 = sbr.rel (%p213) target = $region16
        $region15: #{tpu_custom_call.1} parent=11 // pred_region
          _
        $region16: #{tpu_custom_call.1} parent=11 // pred_fallthru
          _
        // Predicated region
        $region17: #{tpu_custom_call.1} parent=11 // pred_check
          %p216 = pneg %p88
        $region18: #{tpu_custom_call.1} parent=11 // pred_check_branch
          %218 = sbr.rel (%p216) target = $region20
        $region19: #{tpu_custom_call.1} parent=11 // pred_region
          _
        $region20: #{tpu_custom_call.1} parent=11 // pred_fallthru
          _
        // Predicated region
        $region21: #{tpu_custom_call.1} parent=11 // pred_check
          %p219 = pneg %p109
        $region22: #{tpu_custom_call.1} parent=11 // pred_check_branch
          %221 = sbr.rel (%p219) target = $region24
        $region23: #{tpu_custom_call.1} parent=11 // pred_region
          _
        $region24: #{tpu_custom_call.1} parent=11 // pred_fallthru
          _
        // Predicated region
        $region25: #{tpu_custom_call.1} parent=11 // pred_check
          %p222 = pneg %p130
        $region26: #{tpu_custom_call.1} parent=11 // pred_check_branch
          %224 = sbr.rel (%p222) target = $region28
        $region27: #{tpu_custom_call.1} parent=11 // pred_region
          _
        $region28: #{tpu_custom_call.1} parent=11 // pred_fallthru
          _
        // Predicated region
        $region29: #{tpu_custom_call.1} parent=11 // pred_check
          %p225 = pneg %p151
        $region30: #{tpu_custom_call.1} parent=11 // pred_check_branch
          %227 = sbr.rel (%p225) target = $region32
        $region31: #{tpu_custom_call.1} parent=11 // pred_region
          %229 = vsyncadd [#allocation6], 0
          %s230 = sshll.u32 %s5, 4
          %s231 = int_to_ptr.hbm [resolvable:$true] %s230
          %s232 = sshll.u32 [#allocation5], 4
          %s233 = int_to_ptr.vmem [resolvable:$true] %s232
          %238 = dma.hbm_to_vmem [thread:$0]  %s231, 4608, %s233, [#allocation6], 256, 256, 16
        $region32: #{tpu_custom_call.1} parent=11 // pred_fallthru
          _
        // Predicated region
        $region33: #{tpu_custom_call.1} parent=11 // pred_check
          %p239 = pneg %p172
        $region34: #{tpu_custom_call.1} parent=11 // pred_check_branch
          %241 = sbr.rel (%p239) target = $region36
        $region35: #{tpu_custom_call.1} parent=11 // pred_region
          _
        $region36: #{tpu_custom_call.1} parent=11 // pred_fallthru
          _
      $region12: #{tpu_custom_call.1} parent=5 // pred_fallthru
        _
      %p242 = scmp.lt.s32.totalorder %s20, 2
      // Predicated region
      $region37: #{tpu_custom_call.1} parent=5 // pred_check
        %p243 = pneg %p242
      $region38: #{tpu_custom_call.1} parent=5 // pred_check_branch
        %245 = sbr.rel (%p243) target = $region40
      $region39: #{tpu_custom_call.1} parent=5 // pred_region
        // Predicated region
        $region41: #{tpu_custom_call.1} parent=39 // pred_check
          %p246 = pneg %p40
        $region42: #{tpu_custom_call.1} parent=39 // pred_check_branch
          %248 = sbr.rel (%p246) target = $region44
        $region43: #{tpu_custom_call.1} parent=39 // pred_region
          %s249 = sand.u32 %s30, 1
          %s250 = scalar_lea.sflag [#allocation3], %s249
          %s251 = sand.u32 %s30, 1
          %s252 = smul.addr %s251, 32
          %s253 = scalar_lea.vmem [#allocation2], %s252
          %s254 = smul.u32 2, %s20
          %256 = vsyncadd %s250, 0
          %s257 = smul.addr %s254, 2
          %s258 = smul.addr %s257, 8
          %s259 = scalar_lea.hbm %s0, %s258
          %s260 = sshll.u32 %s259, 4
          %s261 = int_to_ptr.hbm [resolvable:$true] %s260
          %s262 = sshll.u32 %s253, 4
          %s263 = int_to_ptr.vmem [resolvable:$true] %s262
          %268 = dma.hbm_to_vmem [thread:$0]  %s261, 512, %s263, %s250, 256, 256, 16
        $region44: #{tpu_custom_call.1} parent=39 // pred_fallthru
          _
      $region40: #{tpu_custom_call.1} parent=5 // pred_fallthru
        _
      %p269 = scmp.le.s32.totalorder 1, %s20
      %p270 = scmp.lt.s32.totalorder %s20, 3
      %p271 = pnand %p269, %p270
      %p272 = pneg %p271
      // Predicated region
      $region45: #{tpu_custom_call.1} parent=5 // pred_check
        _
      $region46: #{tpu_custom_call.1} parent=5 // pred_check_branch
        %274 = sbr.rel (%p271) target = $region48
      $region47: #{tpu_custom_call.1} parent=5 // pred_region
        %s275 = ssub.s32 %s20, 1
        %s276 = sand.u32 %s33, 1
        %s277 = scalar_lea.sflag [#allocation3], %s276
        %s278 = sand.u32 %s33, 1
        %s279 = smul.addr %s278, 32
        %s280 = scalar_lea.vmem [#allocation2], %s279
        // Predicated region
        $region49: #{tpu_custom_call.1} parent=47 // pred_check
          %p281 = pneg %p46
        $region50: #{tpu_custom_call.1} parent=47 // pred_check_branch
          %283 = sbr.rel (%p281) target = $region52
        $region51: #{tpu_custom_call.1} parent=47 // pred_region
          %285 = dma.done %s277, 512
        $region52: #{tpu_custom_call.1} parent=47 // pred_fallthru
          _
        // Predicated region
        $region53: #{tpu_custom_call.1} parent=47 // pred_check
          %p286 = pneg %p151
        $region54: #{tpu_custom_call.1} parent=47 // pred_check_branch
          %288 = sbr.rel (%p286) target = $region56
        $region55: #{tpu_custom_call.1} parent=47 // pred_region
          %290 = dma.done [#allocation6], 4608
        $region56: #{tpu_custom_call.1} parent=47 // pred_fallthru
          _
        %s291 = sand.u32 %s33, 1
        %s292 = scalar_lea.sflag [#allocation3], %s291
        %s293 = sand.u32 %s33, 1
        %s294 = smul.addr %s293, 32
        %s295 = scalar_lea.vmem [#allocation2], %s294
        %p296 = pneg %p46
        %p297 = pneg %p43
        %p298 = pneg %p67
        %p299 = pneg %p64
        %p300 = pneg %p88
        %p301 = pneg %p85
        %p302 = pneg %p109
        %p303 = pneg %p106
        %p304 = pneg %p130
        %p305 = pneg %p127
        %p306 = pneg %p151
        %p307 = pneg %p148
        %p308 = pneg %p172
        %p309 = pneg %p169
        %p310 = pneg %p198
        %p311 = pneg %p195
        %s312 = sand.u32 %s185, 1
        %s313 = scalar_lea.sflag [#allocation4], %s312
        %s314 = sand.u32 %s185, 1
        %s315 = smul.addr %s314, 16
        %s316 = scalar_lea.vmem [#allocation7], %s315
        %s317 = smul.u32 2, %s25
        %s318 = smul.u32 2, %s25
        %v320 = vld [vmem:[%s1] sm:$0xff]
        %v321 = vld [vmem:[%s2] sm:$0xff]
        %v322 = vld [vmem:[%s3] sm:$0xf]
        %v323 = vld [vmem:[%s3 + $0x4] sm:$0xf]
        %v324 = vld [vmem:[%s4] sm:$0xff]
        %v325 = vld [vmem:[%s4 + $0x8] sm:$0xff]
        %v326 = vld [vmem:[%s6] sm:$0x3]
        %v327 = vld [vmem:[%s280] sm:$0xff]
        %v328 = vld [vmem:[%s280 + $0x8] sm:$0xff]
        %330 = vset.pattern.permute.xlu0 0
        %331 = vperm.xlu0 %330, %v320
        %v332 = vpop.permute.xlu0 %331
        %v334 = vmul.f32 %v327, %v332
        %v335 = vmul.f32 %v328, %v332
        %337 = vset.pattern.permute.xlu0 0
        %338 = vperm.xlu0 %337, %v321
        %v339 = vpop.permute.xlu0 %338
        %v341 = vadd.f32 %v334, %v339
        %v342 = vadd.f32 %v335, %v339
        %v343 = vmax.f32 %v341, 0.0
        %v344 = vmax.f32 %v342, 0.0
        %v345 = vpack.c.bf16 %v343, %v343
        %v346 = vpack.c.bf16 %v344, %v344
        %348 = vset.pattern.permute.xlu0 0
        %349 = vperm.xlu0 %348, %v324
        %v350 = vpop.permute.xlu0 %349
        %353 = vset.pattern.permute.xlu0 0
        %354 = vperm.xlu0 %353, %v325
        %v355 = vpop.permute.xlu0 %354
        %v359 = vunpack.c.l.b16 %v322
        %v360 = vunpack.c.l.b16 %v323
        %v361 = vpack.c.b16 %v360, %v359
        %vm362 = vcmask 64512
        %v364 = vsel %vm362, %v361, 0
        %vm366 = vcmask 1043456
        %v368 = vsel %vm366, %v345, 0
        %v371 = vsel %vm366, %v346, 0
        %373 = vmatpush.bf16.msra.mxu0 0
        %374 = vmatpush.bf16.msra.mxu0 0
        %375 = vmatpush.bf16.msra.mxu0 0
        %376 = vmatpush.bf16.msra.mxu0 0
        %377 = vmatpush.bf16.msra.mxu0 0
        %378 = vmatpush.bf16.msra.mxu0 0
        %379 = vmatpush.bf16.msra.mxu0 0
        %380 = vmatpush.bf16.msra.mxu0 %v368
        %381 = vmatmul.bf16.gmra.mxu0 %v364
        %v382 = vpop.f32.mrf.mxu0
        %v383 = vadd.f32 %v350, %v382
        %v384 = vpop.f32.mrf.mxu0
        %v385 = vadd.f32 %v355, %v384
        %386 = vdwg.mxu0
        %387 = vmatpush.bf16.msra.mxu0 0
        %388 = vmatpush.bf16.msra.mxu0 0
        %389 = vmatpush.bf16.msra.mxu0 0
        %390 = vmatpush.bf16.msra.mxu0 0
        %391 = vmatpush.bf16.msra.mxu0 0
        %392 = vmatpush.bf16.msra.mxu0 0
        %393 = vmatpush.bf16.msra.mxu0 0
        %394 = vmatpush.bf16.msra.mxu0 %v371
        %395 = vmatmul.bf16.gmra.mxu0 %v364
        %v396 = vpop.f32.mrf.mxu0
        %v397 = vadd.f32 %v350, %v396
        %v398 = vpop.f32.mrf.mxu0
        %v399 = vadd.f32 %v355, %v398
        %400 = vdwg.mxu0
        %v401 = vmax.f32 %v383, 0.0
        %v402 = vmax.f32 %v397, 0.0
        %v403 = vmax.f32 %v385, 0.0
        %v404 = vmax.f32 %v399, 0.0
        %405 = vrot.lane.b32.xlu0 %v401, 17
        %v406 = vpop.permute.xlu0 %405
        %407 = vrot.lane.b32.xlu0 %v403, 17
        %v408 = vpop.permute.xlu0 %407
        %409 = vrot.lane.b32.xlu0 %v402, 17
        %v410 = vpop.permute.xlu0 %409
        %411 = vrot.lane.b32.xlu0 %v404, 17
        %v412 = vpop.permute.xlu0 %411
        %v413 = vlaneseq
        %v414 = vand.u32 %v413, 127
        %vm415 = vcmp.lt.s32.totalorder %v414, 17
        %v416 = vsel %vm415, %v406, %v410
        %v417 = vsel %vm415, %v408, %v412
        %v418 = vsel %vm415, %v410, %v406
        %v419 = vsel %vm415, %v412, %v408
        %v420 = vld [vmem:[#allocation5] sm:$0xff]
        %v421 = vld [vmem:[#allocation5 + $0x8] sm:$0xff]
        %v422 = vld [vmem:[#allocation5 + $0x10] sm:$0xff]
        %v423 = vld [vmem:[#allocation5 + $0x18] sm:$0xff]
        %v424 = vmul.f32 %v418, %v420
        %v425 = vmul.f32 %v416, %v421
        %v426 = vmul.f32 %v419, %v422
        %v427 = vmul.f32 %v417, %v423
        %428 = vrot.lane.b32.xlu0 %v401, 16
        %v429 = vpop.permute.xlu0 %428
        %430 = vrot.lane.b32.xlu0 %v403, 16
        %v431 = vpop.permute.xlu0 %430
        %432 = vrot.lane.b32.xlu0 %v402, 16
        %v433 = vpop.permute.xlu0 %432
        %434 = vrot.lane.b32.xlu0 %v404, 16
        %v435 = vpop.permute.xlu0 %434
        %vm436 = vcmp.lt.s32.totalorder %v414, 16
        %v437 = vsel %vm436, %v429, %v433
        %v438 = vsel %vm436, %v431, %v435
        %v439 = vsel %vm436, %v433, %v429
        %v440 = vsel %vm436, %v435, %v431
        %s441 = scalar_lea.vmem [#allocation5], 32
        %v442 = vld [vmem:[%s441] sm:$0xff]
        %v443 = vld [vmem:[%s441 + $0x8] sm:$0xff]
        %v444 = vld [vmem:[%s441 + $0x10] sm:$0xff]
        %v445 = vld [vmem:[%s441 + $0x18] sm:$0xff]
        %v446 = vmul.f32 %v439, %v442
        %v447 = vmul.f32 %v437, %v443
        %v448 = vmul.f32 %v440, %v444
        %v449 = vmul.f32 %v438, %v445
        %v450 = vadd.f32 %v424, %v446
        %v451 = vadd.f32 %v425, %v447
        %v452 = vadd.f32 %v426, %v448
        %v453 = vadd.f32 %v427, %v449
        %454 = vrot.lane.b32.xlu0 %v401, 15
        %v455 = vpop.permute.xlu0 %454
        %456 = vrot.lane.b32.xlu0 %v403, 15
        %v457 = vpop.permute.xlu0 %456
        %458 = vrot.lane.b32.xlu0 %v402, 15
        %v459 = vpop.permute.xlu0 %458
        %460 = vrot.lane.b32.xlu0 %v404, 15
        %v461 = vpop.permute.xlu0 %460
        %vm462 = vcmp.lt.s32.totalorder %v414, 15
        %v463 = vsel %vm462, %v455, %v459
        %v464 = vsel %vm462, %v457, %v461
        %v465 = vsel %vm462, %v459, %v455
        %v466 = vsel %vm462, %v461, %v457
        %s467 = scalar_lea.vmem [#allocation5], 64
        %v468 = vld [vmem:[%s467] sm:$0xff]
        %v469 = vld [vmem:[%s467 + $0x8] sm:$0xff]
        %v470 = vld [vmem:[%s467 + $0x10] sm:$0xff]
        %v471 = vld [vmem:[%s467 + $0x18] sm:$0xff]
        %v472 = vmul.f32 %v465, %v468
        %v473 = vmul.f32 %v463, %v469
        %v474 = vmul.f32 %v466, %v470
        %v475 = vmul.f32 %v464, %v471
        %v476 = vadd.f32 %v450, %v472
        %v477 = vadd.f32 %v451, %v473
        %v478 = vadd.f32 %v452, %v474
        %v479 = vadd.f32 %v453, %v475
        %480 = vrot.lane.b32.xlu0 %v401, 1
        %v481 = vpop.permute.xlu0 %480
        %482 = vrot.lane.b32.xlu0 %v403, 1
        %v483 = vpop.permute.xlu0 %482
        %484 = vrot.lane.b32.xlu0 %v402, 1
        %v485 = vpop.permute.xlu0 %484
        %486 = vrot.lane.b32.xlu0 %v404, 1
        %v487 = vpop.permute.xlu0 %486
        %vm488 = vcmp.lt.s32.totalorder %v414, 1
        %v489 = vsel %vm488, %v481, %v485
        %v490 = vsel %vm488, %v483, %v487
        %v491 = vsel %vm488, %v485, %v481
        %v492 = vsel %vm488, %v487, %v483
        %s493 = scalar_lea.vmem [#allocation5], 96
        %v494 = vld [vmem:[%s493] sm:$0xff]
        %v495 = vld [vmem:[%s493 + $0x8] sm:$0xff]
        %v496 = vld [vmem:[%s493 + $0x10] sm:$0xff]
        %v497 = vld [vmem:[%s493 + $0x18] sm:$0xff]
        %v498 = vmul.f32 %v491, %v494
        %v499 = vmul.f32 %v489, %v495
        %v500 = vmul.f32 %v492, %v496
        %v501 = vmul.f32 %v490, %v497
        %v502 = vadd.f32 %v476, %v498
        %v503 = vadd.f32 %v477, %v499
        %v504 = vadd.f32 %v478, %v500
        %v505 = vadd.f32 %v479, %v501
        %s506 = scalar_lea.vmem [#allocation5], 128
        %v507 = vld [vmem:[%s506] sm:$0xff]
        %v508 = vld [vmem:[%s506 + $0x8] sm:$0xff]
        %v509 = vld [vmem:[%s506 + $0x10] sm:$0xff]
        %v510 = vld [vmem:[%s506 + $0x18] sm:$0xff]
        %v511 = vmul.f32 %v401, %v507
        %v512 = vmul.f32 %v402, %v508
        %v513 = vmul.f32 %v403, %v509
        %v514 = vmul.f32 %v404, %v510
        %v515 = vadd.f32 %v502, %v511
        %v516 = vadd.f32 %v503, %v512
        %v517 = vadd.f32 %v504, %v513
        %v518 = vadd.f32 %v505, %v514
        %519 = vrot.lane.b32.xlu0 %v401, 127
        %v520 = vpop.permute.xlu0 %519
        %521 = vrot.lane.b32.xlu0 %v403, 127
        %v522 = vpop.permute.xlu0 %521
        %523 = vrot.lane.b32.xlu0 %v402, 127
        %v524 = vpop.permute.xlu0 %523
        %525 = vrot.lane.b32.xlu0 %v404, 127
        %v526 = vpop.permute.xlu0 %525
        %vm527 = vcmp.lt.s32.totalorder %v414, 127
        %v528 = vsel %vm527, %v520, %v524
        %v529 = vsel %vm527, %v522, %v526
        %v530 = vsel %vm527, %v524, %v520
        %v531 = vsel %vm527, %v526, %v522
        %s532 = scalar_lea.vmem [#allocation5], 160
        %v533 = vld [vmem:[%s532] sm:$0xff]
        %v534 = vld [vmem:[%s532 + $0x8] sm:$0xff]
        %v535 = vld [vmem:[%s532 + $0x10] sm:$0xff]
        %v536 = vld [vmem:[%s532 + $0x18] sm:$0xff]
        %v537 = vmul.f32 %v528, %v533
        %v538 = vmul.f32 %v530, %v534
        %v539 = vmul.f32 %v529, %v535
        %v540 = vmul.f32 %v531, %v536
        %v541 = vadd.f32 %v515, %v537
        %v542 = vadd.f32 %v516, %v538
        %v543 = vadd.f32 %v517, %v539
        %v544 = vadd.f32 %v518, %v540
        %545 = vrot.lane.b32.xlu0 %v401, 113
        %v546 = vpop.permute.xlu0 %545
        %547 = vrot.lane.b32.xlu0 %v403, 113
        %v548 = vpop.permute.xlu0 %547
        %549 = vrot.lane.b32.xlu0 %v402, 113
        %v550 = vpop.permute.xlu0 %549
        %551 = vrot.lane.b32.xlu0 %v404, 113
        %v552 = vpop.permute.xlu0 %551
        %vm553 = vcmp.lt.s32.totalorder %v414, 113
        %v554 = vsel %vm553, %v546, %v550
        %v555 = vsel %vm553, %v548, %v552
        %v556 = vsel %vm553, %v550, %v546
        %v557 = vsel %vm553, %v552, %v548
        %s558 = scalar_lea.vmem [#allocation5], 192
        %v559 = vld [vmem:[%s558] sm:$0xff]
        %v560 = vld [vmem:[%s558 + $0x8] sm:$0xff]
        %v561 = vld [vmem:[%s558 + $0x10] sm:$0xff]
        %v562 = vld [vmem:[%s558 + $0x18] sm:$0xff]
        %v563 = vmul.f32 %v554, %v559
        %v564 = vmul.f32 %v556, %v560
        %v565 = vmul.f32 %v555, %v561
        %v566 = vmul.f32 %v557, %v562
        %v567 = vadd.f32 %v541, %v563
        %v568 = vadd.f32 %v542, %v564
        %v569 = vadd.f32 %v543, %v565
        %v570 = vadd.f32 %v544, %v566
        %571 = vrot.lane.b32.xlu0 %v401, 112
        %v572 = vpop.permute.xlu0 %571
        %573 = vrot.lane.b32.xlu0 %v403, 112
        %v574 = vpop.permute.xlu0 %573
        %575 = vrot.lane.b32.xlu0 %v402, 112
        %v576 = vpop.permute.xlu0 %575
        %577 = vrot.lane.b32.xlu0 %v404, 112
        %v578 = vpop.permute.xlu0 %577
        %vm579 = vcmp.lt.s32.totalorder %v414, 112
        %v580 = vsel %vm579, %v572, %v576
        %v581 = vsel %vm579, %v574, %v578
        %v582 = vsel %vm579, %v576, %v572
        %v583 = vsel %vm579, %v578, %v574
        %s584 = scalar_lea.vmem [#allocation5], 224
        %v585 = vld [vmem:[%s584] sm:$0xff]
        %v586 = vld [vmem:[%s584 + $0x8] sm:$0xff]
        %v587 = vld [vmem:[%s584 + $0x10] sm:$0xff]
        %v588 = vld [vmem:[%s584 + $0x18] sm:$0xff]
        %v589 = vmul.f32 %v580, %v585
        %v590 = vmul.f32 %v582, %v586
        %v591 = vmul.f32 %v581, %v587
        %v592 = vmul.f32 %v583, %v588
        %v593 = vadd.f32 %v567, %v589
        %v594 = vadd.f32 %v568, %v590
        %v595 = vadd.f32 %v569, %v591
        %v596 = vadd.f32 %v570, %v592
        %597 = vrot.lane.b32.xlu0 %v401, 111
        %v598 = vpop.permute.xlu0 %597
        %599 = vrot.lane.b32.xlu0 %v403, 111
        %v600 = vpop.permute.xlu0 %599
        %601 = vrot.lane.b32.xlu0 %v402, 111
        %v602 = vpop.permute.xlu0 %601
        %603 = vrot.lane.b32.xlu0 %v404, 111
        %v604 = vpop.permute.xlu0 %603
        %vm605 = vcmp.lt.s32.totalorder %v414, 111
        %v606 = vsel %vm605, %v598, %v602
        %v607 = vsel %vm605, %v600, %v604
        %v608 = vsel %vm605, %v602, %v598
        %v609 = vsel %vm605, %v604, %v600
        %s610 = scalar_lea.vmem [#allocation5], 256
        %v611 = vld [vmem:[%s610] sm:$0xff]
        %v612 = vld [vmem:[%s610 + $0x8] sm:$0xff]
        %v613 = vld [vmem:[%s610 + $0x10] sm:$0xff]
        %v614 = vld [vmem:[%s610 + $0x18] sm:$0xff]
        %v615 = vmul.f32 %v606, %v611
        %v616 = vmul.f32 %v608, %v612
        %v617 = vmul.f32 %v607, %v613
        %v618 = vmul.f32 %v609, %v614
        %v619 = vadd.f32 %v593, %v615
        %v620 = vadd.f32 %v594, %v616
        %v621 = vadd.f32 %v595, %v617
        %v622 = vadd.f32 %v596, %v618
        %623 = vrot.lane.b32.xlu0 %v619, 17
        %v624 = vpop.permute.xlu0 %623
        %625 = vrot.lane.b32.xlu0 %v621, 17
        %v626 = vpop.permute.xlu0 %625
        %627 = vrot.lane.b32.xlu0 %v620, 17
        %v628 = vpop.permute.xlu0 %627
        %629 = vrot.lane.b32.xlu0 %v622, 17
        %v630 = vpop.permute.xlu0 %629
        %v631 = vsel %vm415, %v624, %v628
        %v632 = vsel %vm415, %v626, %v630
        %v633 = vsel %vm415, %v628, %v624
        %v634 = vsel %vm415, %v630, %v626
        %v635 = vmul.f32 %v633, %v420
        %v636 = vmul.f32 %v631, %v421
        %v637 = vmul.f32 %v634, %v422
        %v638 = vmul.f32 %v632, %v423
        %639 = vrot.lane.b32.xlu0 %v619, 16
        %v640 = vpop.permute.xlu0 %639
        %641 = vrot.lane.b32.xlu0 %v621, 16
        %v642 = vpop.permute.xlu0 %641
        %643 = vrot.lane.b32.xlu0 %v620, 16
        %v644 = vpop.permute.xlu0 %643
        %645 = vrot.lane.b32.xlu0 %v622, 16
        %v646 = vpop.permute.xlu0 %645
        %v647 = vsel %vm436, %v640, %v644
        %v648 = vsel %vm436, %v642, %v646
        %v649 = vsel %vm436, %v644, %v640
        %v650 = vsel %vm436, %v646, %v642
        %v651 = vmul.f32 %v649, %v442
        %v652 = vmul.f32 %v647, %v443
        %v653 = vmul.f32 %v650, %v444
        %v654 = vmul.f32 %v648, %v445
        %v655 = vadd.f32 %v635, %v651
        %v656 = vadd.f32 %v636, %v652
        %v657 = vadd.f32 %v637, %v653
        %v658 = vadd.f32 %v638, %v654
        %659 = vrot.lane.b32.xlu0 %v619, 15
        %v660 = vpop.permute.xlu0 %659
        %661 = vrot.lane.b32.xlu0 %v621, 15
        %v662 = vpop.permute.xlu0 %661
        %663 = vrot.lane.b32.xlu0 %v620, 15
        %v664 = vpop.permute.xlu0 %663
        %665 = vrot.lane.b32.xlu0 %v622, 15
        %v666 = vpop.permute.xlu0 %665
        %v667 = vsel %vm462, %v660, %v664
        %v668 = vsel %vm462, %v662, %v666
        %v669 = vsel %vm462, %v664, %v660
        %v670 = vsel %vm462, %v666, %v662
        %v671 = vmul.f32 %v669, %v468
        %v672 = vmul.f32 %v667, %v469
        %v673 = vmul.f32 %v670, %v470
        %v674 = vmul.f32 %v668, %v471
        %v675 = vadd.f32 %v655, %v671
        %v676 = vadd.f32 %v656, %v672
        %v677 = vadd.f32 %v657, %v673
        %v678 = vadd.f32 %v658, %v674
        %679 = vrot.lane.b32.xlu0 %v619, 1
        %v680 = vpop.permute.xlu0 %679
        %681 = vrot.lane.b32.xlu0 %v621, 1
        %v682 = vpop.permute.xlu0 %681
        %683 = vrot.lane.b32.xlu0 %v620, 1
        %v684 = vpop.permute.xlu0 %683
        %685 = vrot.lane.b32.xlu0 %v622, 1
        %v686 = vpop.permute.xlu0 %685
        %v687 = vsel %vm488, %v680, %v684
        %v688 = vsel %vm488, %v682, %v686
        %v689 = vsel %vm488, %v684, %v680
        %v690 = vsel %vm488, %v686, %v682
        %v691 = vmul.f32 %v689, %v494
        %v692 = vmul.f32 %v687, %v495
        %v693 = vmul.f32 %v690, %v496
        %v694 = vmul.f32 %v688, %v497
        %v695 = vadd.f32 %v675, %v691
        %v696 = vadd.f32 %v676, %v692
        %v697 = vadd.f32 %v677, %v693
        %v698 = vadd.f32 %v678, %v694
        %v699 = vmul.f32 %v619, %v507
        %v700 = vmul.f32 %v620, %v508
        %v701 = vmul.f32 %v621, %v509
        %v702 = vmul.f32 %v622, %v510
        %v703 = vadd.f32 %v695, %v699
        %v704 = vadd.f32 %v696, %v700
        %v705 = vadd.f32 %v697, %v701
        %v706 = vadd.f32 %v698, %v702
        %707 = vrot.lane.b32.xlu0 %v619, 127
        %v708 = vpop.permute.xlu0 %707
        %709 = vrot.lane.b32.xlu0 %v621, 127
        %v710 = vpop.permute.xlu0 %709
        %711 = vrot.lane.b32.xlu0 %v620, 127
        %v712 = vpop.permute.xlu0 %711
        %713 = vrot.lane.b32.xlu0 %v622, 127
        %v714 = vpop.permute.xlu0 %713
        %v715 = vsel %vm527, %v708, %v712
        %v716 = vsel %vm527, %v710, %v714
        %v717 = vsel %vm527, %v712, %v708
        %v718 = vsel %vm527, %v714, %v710
        %v719 = vmul.f32 %v715, %v533
        %v720 = vmul.f32 %v717, %v534
        %v721 = vmul.f32 %v716, %v535
        %v722 = vmul.f32 %v718, %v536
        %v723 = vadd.f32 %v703, %v719
        %v724 = vadd.f32 %v704, %v720
        %v725 = vadd.f32 %v705, %v721
        %v726 = vadd.f32 %v706, %v722
        %727 = vrot.lane.b32.xlu0 %v619, 113
        %v728 = vpop.permute.xlu0 %727
        %729 = vrot.lane.b32.xlu0 %v621, 113
        %v730 = vpop.permute.xlu0 %729
        %731 = vrot.lane.b32.xlu0 %v620, 113
        %v732 = vpop.permute.xlu0 %731
        %733 = vrot.lane.b32.xlu0 %v622, 113
        %v734 = vpop.permute.xlu0 %733
        %v735 = vsel %vm553, %v728, %v732
        %v736 = vsel %vm553, %v730, %v734
        %v737 = vsel %vm553, %v732, %v728
        %v738 = vsel %vm553, %v734, %v730
        %v739 = vmul.f32 %v735, %v559
        %v740 = vmul.f32 %v737, %v560
        %v741 = vmul.f32 %v736, %v561
        %v742 = vmul.f32 %v738, %v562
        %v743 = vadd.f32 %v723, %v739
        %v744 = vadd.f32 %v724, %v740
        %v745 = vadd.f32 %v725, %v741
        %v746 = vadd.f32 %v726, %v742
        %747 = vrot.lane.b32.xlu0 %v619, 112
        %v748 = vpop.permute.xlu0 %747
        %749 = vrot.lane.b32.xlu0 %v621, 112
        %v750 = vpop.permute.xlu0 %749
        %751 = vrot.lane.b32.xlu0 %v620, 112
        %v752 = vpop.permute.xlu0 %751
        %753 = vrot.lane.b32.xlu0 %v622, 112
        %v754 = vpop.permute.xlu0 %753
        %v755 = vsel %vm579, %v748, %v752
        %v756 = vsel %vm579, %v750, %v754
        %v757 = vsel %vm579, %v752, %v748
        %v758 = vsel %vm579, %v754, %v750
        %v759 = vmul.f32 %v755, %v585
        %v760 = vmul.f32 %v757, %v586
        %v761 = vmul.f32 %v756, %v587
        %v762 = vmul.f32 %v758, %v588
        %v763 = vadd.f32 %v743, %v759
        %v764 = vadd.f32 %v744, %v760
        %v765 = vadd.f32 %v745, %v761
        %v766 = vadd.f32 %v746, %v762
        %767 = vrot.lane.b32.xlu0 %v619, 111
        %v768 = vpop.permute.xlu0 %767
        %769 = vrot.lane.b32.xlu0 %v621, 111
        %v770 = vpop.permute.xlu0 %769
        %771 = vrot.lane.b32.xlu0 %v620, 111
        %v772 = vpop.permute.xlu0 %771
        %773 = vrot.lane.b32.xlu0 %v622, 111
        %v774 = vpop.permute.xlu0 %773
        %v775 = vsel %vm605, %v768, %v772
        %v776 = vsel %vm605, %v770, %v774
        %v777 = vsel %vm605, %v772, %v768
        %v778 = vsel %vm605, %v774, %v770
        %v779 = vmul.f32 %v775, %v611
        %v780 = vmul.f32 %v777, %v612
        %v781 = vmul.f32 %v776, %v613
        %v782 = vmul.f32 %v778, %v614
        %v783 = vadd.f32 %v763, %v779
        %v784 = vadd.f32 %v764, %v780
        %v785 = vadd.f32 %v765, %v781
        %v786 = vadd.f32 %v766, %v782
        %v787 = vadd.f32 %v619, %v783
        %v788 = vadd.f32 %v620, %v784
        %v789 = vadd.f32 %v621, %v785
        %v790 = vadd.f32 %v622, %v786
        %v791 = vpack.c.bf16 %v789, %v787
        %v792 = vpack.c.bf16 %v790, %v788
        %vm793 = vcmask 130048
        %v795 = vsel %vm793, %v326, 0
        %797 = vmatpush.bf16.msra.mxu0 0
        %798 = vmatpush.bf16.msra.mxu0 0
        %799 = vmatpush.bf16.msra.mxu0 0
        %800 = vmatpush.bf16.msra.mxu0 0
        %801 = vmatpush.bf16.msra.mxu0 0
        %802 = vmatpush.bf16.msra.mxu0 0
        %803 = vmatpush.bf16.msra.mxu0 0
        %804 = vmatpush.bf16.msra.mxu0 %v791
        %805 = vmatmul.bf16.gmra.mxu0 %v795
        %v806 = vpop.f32.mrf.mxu0
        %v807 = vadd.f32 0.0, %v806
        %v808 = vpop.f32.mrf.mxu0
        %809 = vdwg.mxu0
        %810 = vmatpush.bf16.msra.mxu0 0
        %811 = vmatpush.bf16.msra.mxu0 0
        %812 = vmatpush.bf16.msra.mxu0 0
        %813 = vmatpush.bf16.msra.mxu0 0
        %814 = vmatpush.bf16.msra.mxu0 0
        %815 = vmatpush.bf16.msra.mxu0 0
        %816 = vmatpush.bf16.msra.mxu0 0
        %817 = vmatpush.bf16.msra.mxu0 %v792
        %818 = vmatmul.bf16.gmra.mxu0 %v795
        %v819 = vpop.f32.mrf.mxu0
        %v820 = vadd.f32 0.0, %v819
        %v821 = vpop.f32.mrf.mxu0
        %822 = vdwg.mxu0
        %v825 = vrot.slane %v820, 4
        %v826 = vsel %vm366, %v807, %v825
        %828 = vst [vmem:[%s316] sm:$0xff] %v826
        %s829 = scalar_lea.vmem %s280, 16 [#allocation2]
        %v830 = vld [vmem:[%s829] sm:$0xff]
        %v831 = vld [vmem:[%s829 + $0x8] sm:$0xff]
        %v832 = vmul.f32 %v830, %v332
        %v833 = vmul.f32 %v831, %v332
        %v834 = vadd.f32 %v832, %v339
        %v835 = vadd.f32 %v833, %v339
        %v836 = vmax.f32 %v834, 0.0
        %v837 = vmax.f32 %v835, 0.0
        %v838 = vpack.c.bf16 %v836, %v836
        %v839 = vpack.c.bf16 %v837, %v837
        %v841 = vsel %vm366, %v838, 0
        %v844 = vsel %vm366, %v839, 0
        %846 = vmatpush.bf16.msra.mxu0 0
        %847 = vmatpush.bf16.msra.mxu0 0
        %848 = vmatpush.bf16.msra.mxu0 0
        %849 = vmatpush.bf16.msra.mxu0 0
        %850 = vmatpush.bf16.msra.mxu0 0
        %851 = vmatpush.bf16.msra.mxu0 0
        %852 = vmatpush.bf16.msra.mxu0 0
        %853 = vmatpush.bf16.msra.mxu0 %v841
        %854 = vmatmul.bf16.gmra.mxu0 %v364
        %v855 = vpop.f32.mrf.mxu0
        %v856 = vadd.f32 %v350, %v855
        %v857 = vpop.f32.mrf.mxu0
        %v858 = vadd.f32 %v355, %v857
        %859 = vdwg.mxu0
        %860 = vmatpush.bf16.msra.mxu0 0
        %861 = vmatpush.bf16.msra.mxu0 0
        %862 = vmatpush.bf16.msra.mxu0 0
        %863 = vmatpush.bf16.msra.mxu0 0
        %864 = vmatpush.bf16.msra.mxu0 0
        %865 = vmatpush.bf16.msra.mxu0 0
        %866 = vmatpush.bf16.msra.mxu0 0
        %867 = vmatpush.bf16.msra.mxu0 %v844
        %868 = vmatmul.bf16.gmra.mxu0 %v364
        %v869 = vpop.f32.mrf.mxu0
        %v870 = vadd.f32 %v350, %v869
        %v871 = vpop.f32.mrf.mxu0
        %v872 = vadd.f32 %v355, %v871
        %873 = vdwg.mxu0
        %v874 = vmax.f32 %v856, 0.0
        %v875 = vmax.f32 %v870, 0.0
        %v876 = vmax.f32 %v858, 0.0
        %v877 = vmax.f32 %v872, 0.0
        %878 = vrot.lane.b32.xlu0 %v874, 17
        %v879 = vpop.permute.xlu0 %878
        %880 = vrot.lane.b32.xlu0 %v876, 17
        %v881 = vpop.permute.xlu0 %880
        %882 = vrot.lane.b32.xlu0 %v875, 17
        %v883 = vpop.permute.xlu0 %882
        %884 = vrot.lane.b32.xlu0 %v877, 17
        %v885 = vpop.permute.xlu0 %884
        %v886 = vsel %vm415, %v879, %v883
        %v887 = vsel %vm415, %v881, %v885
        %v888 = vsel %vm415, %v883, %v879
        %v889 = vsel %vm415, %v885, %v881
        %v890 = vld [vmem:[#allocation5] sm:$0xff]
        %v891 = vld [vmem:[#allocation5 + $0x8] sm:$0xff]
        %v892 = vld [vmem:[#allocation5 + $0x10] sm:$0xff]
        %v893 = vld [vmem:[#allocation5 + $0x18] sm:$0xff]
        %v894 = vmul.f32 %v888, %v890
        %v895 = vmul.f32 %v886, %v891
        %v896 = vmul.f32 %v889, %v892
        %v897 = vmul.f32 %v887, %v893
        %898 = vrot.lane.b32.xlu0 %v874, 16
        %v899 = vpop.permute.xlu0 %898
        %900 = vrot.lane.b32.xlu0 %v876, 16
        %v901 = vpop.permute.xlu0 %900
        %902 = vrot.lane.b32.xlu0 %v875, 16
        %v903 = vpop.permute.xlu0 %902
        %904 = vrot.lane.b32.xlu0 %v877, 16
        %v905 = vpop.permute.xlu0 %904
        %v906 = vsel %vm436, %v899, %v903
        %v907 = vsel %vm436, %v901, %v905
        %v908 = vsel %vm436, %v903, %v899
        %v909 = vsel %vm436, %v905, %v901
        %v910 = vld [vmem:[%s441] sm:$0xff]
        %v911 = vld [vmem:[%s441 + $0x8] sm:$0xff]
        %v912 = vld [vmem:[%s441 + $0x10] sm:$0xff]
        %v913 = vld [vmem:[%s441 + $0x18] sm:$0xff]
        %v914 = vmul.f32 %v908, %v910
        %v915 = vmul.f32 %v906, %v911
        %v916 = vmul.f32 %v909, %v912
        %v917 = vmul.f32 %v907, %v913
        %v918 = vadd.f32 %v894, %v914
        %v919 = vadd.f32 %v895, %v915
        %v920 = vadd.f32 %v896, %v916
        %v921 = vadd.f32 %v897, %v917
        %922 = vrot.lane.b32.xlu0 %v874, 15
        %v923 = vpop.permute.xlu0 %922
        %924 = vrot.lane.b32.xlu0 %v876, 15
        %v925 = vpop.permute.xlu0 %924
        %926 = vrot.lane.b32.xlu0 %v875, 15
        %v927 = vpop.permute.xlu0 %926
        %928 = vrot.lane.b32.xlu0 %v877, 15
        %v929 = vpop.permute.xlu0 %928
        %v930 = vsel %vm462, %v923, %v927
        %v931 = vsel %vm462, %v925, %v929
        %v932 = vsel %vm462, %v927, %v923
        %v933 = vsel %vm462, %v929, %v925
        %v934 = vld [vmem:[%s467] sm:$0xff]
        %v935 = vld [vmem:[%s467 + $0x8] sm:$0xff]
        %v936 = vld [vmem:[%s467 + $0x10] sm:$0xff]
        %v937 = vld [vmem:[%s467 + $0x18] sm:$0xff]
        %v938 = vmul.f32 %v932, %v934
        %v939 = vmul.f32 %v930, %v935
        %v940 = vmul.f32 %v933, %v936
        %v941 = vmul.f32 %v931, %v937
        %v942 = vadd.f32 %v918, %v938
        %v943 = vadd.f32 %v919, %v939
        %v944 = vadd.f32 %v920, %v940
        %v945 = vadd.f32 %v921, %v941
        %946 = vrot.lane.b32.xlu0 %v874, 1
        %v947 = vpop.permute.xlu0 %946
        %948 = vrot.lane.b32.xlu0 %v876, 1
        %v949 = vpop.permute.xlu0 %948
        %950 = vrot.lane.b32.xlu0 %v875, 1
        %v951 = vpop.permute.xlu0 %950
        %952 = vrot.lane.b32.xlu0 %v877, 1
        %v953 = vpop.permute.xlu0 %952
        %v954 = vsel %vm488, %v947, %v951
        %v955 = vsel %vm488, %v949, %v953
        %v956 = vsel %vm488, %v951, %v947
        %v957 = vsel %vm488, %v953, %v949
        %v958 = vld [vmem:[%s493] sm:$0xff]
        %v959 = vld [vmem:[%s493 + $0x8] sm:$0xff]
        %v960 = vld [vmem:[%s493 + $0x10] sm:$0xff]
        %v961 = vld [vmem:[%s493 + $0x18] sm:$0xff]
        %v962 = vmul.f32 %v956, %v958
        %v963 = vmul.f32 %v954, %v959
        %v964 = vmul.f32 %v957, %v960
        %v965 = vmul.f32 %v955, %v961
        %v966 = vadd.f32 %v942, %v962
        %v967 = vadd.f32 %v943, %v963
        %v968 = vadd.f32 %v944, %v964
        %v969 = vadd.f32 %v945, %v965
        %v970 = vld [vmem:[%s506] sm:$0xff]
        %v971 = vld [vmem:[%s506 + $0x8] sm:$0xff]
        %v972 = vld [vmem:[%s506 + $0x10] sm:$0xff]
        %v973 = vld [vmem:[%s506 + $0x18] sm:$0xff]
        %v974 = vmul.f32 %v874, %v970
        %v975 = vmul.f32 %v875, %v971
        %v976 = vmul.f32 %v876, %v972
        %v977 = vmul.f32 %v877, %v973
        %v978 = vadd.f32 %v966, %v974
        %v979 = vadd.f32 %v967, %v975
        %v980 = vadd.f32 %v968, %v976
        %v981 = vadd.f32 %v969, %v977
        %982 = vrot.lane.b32.xlu0 %v874, 127
        %v983 = vpop.permute.xlu0 %982
        %984 = vrot.lane.b32.xlu0 %v876, 127
        %v985 = vpop.permute.xlu0 %984
        %986 = vrot.lane.b32.xlu0 %v875, 127
        %v987 = vpop.permute.xlu0 %986
        %988 = vrot.lane.b32.xlu0 %v877, 127
        %v989 = vpop.permute.xlu0 %988
        %v990 = vsel %vm527, %v983, %v987
        %v991 = vsel %vm527, %v985, %v989
        %v992 = vsel %vm527, %v987, %v983
        %v993 = vsel %vm527, %v989, %v985
        %v994 = vld [vmem:[%s532] sm:$0xff]
        %v995 = vld [vmem:[%s532 + $0x8] sm:$0xff]
        %v996 = vld [vmem:[%s532 + $0x10] sm:$0xff]
        %v997 = vld [vmem:[%s532 + $0x18] sm:$0xff]
        %v998 = vmul.f32 %v990, %v994
        %v999 = vmul.f32 %v992, %v995
        %v1000 = vmul.f32 %v991, %v996
        %v1001 = vmul.f32 %v993, %v997
        %v1002 = vadd.f32 %v978, %v998
        %v1003 = vadd.f32 %v979, %v999
        %v1004 = vadd.f32 %v980, %v1000
        %v1005 = vadd.f32 %v981, %v1001
        %1006 = vrot.lane.b32.xlu0 %v874, 113
        %v1007 = vpop.permute.xlu0 %1006
        %1008 = vrot.lane.b32.xlu0 %v876, 113
        %v1009 = vpop.permute.xlu0 %1008
        %1010 = vrot.lane.b32.xlu0 %v875, 113
        %v1011 = vpop.permute.xlu0 %1010
        %1012 = vrot.lane.b32.xlu0 %v877, 113
        %v1013 = vpop.permute.xlu0 %1012
        %v1014 = vsel %vm553, %v1007, %v1011
        %v1015 = vsel %vm553, %v1009, %v1013
        %v1016 = vsel %vm553, %v1011, %v1007
        %v1017 = vsel %vm553, %v1013, %v1009
        %v1018 = vld [vmem:[%s558] sm:$0xff]
        %v1019 = vld [vmem:[%s558 + $0x8] sm:$0xff]
        %v1020 = vld [vmem:[%s558 + $0x10] sm:$0xff]
        %v1021 = vld [vmem:[%s558 + $0x18] sm:$0xff]
        %v1022 = vmul.f32 %v1014, %v1018
        %v1023 = vmul.f32 %v1016, %v1019
        %v1024 = vmul.f32 %v1015, %v1020
        %v1025 = vmul.f32 %v1017, %v1021
        %v1026 = vadd.f32 %v1002, %v1022
        %v1027 = vadd.f32 %v1003, %v1023
        %v1028 = vadd.f32 %v1004, %v1024
        %v1029 = vadd.f32 %v1005, %v1025
        %1030 = vrot.lane.b32.xlu0 %v874, 112
        %v1031 = vpop.permute.xlu0 %1030
        %1032 = vrot.lane.b32.xlu0 %v876, 112
        %v1033 = vpop.permute.xlu0 %1032
        %1034 = vrot.lane.b32.xlu0 %v875, 112
        %v1035 = vpop.permute.xlu0 %1034
        %1036 = vrot.lane.b32.xlu0 %v877, 112
        %v1037 = vpop.permute.xlu0 %1036
        %v1038 = vsel %vm579, %v1031, %v1035
        %v1039 = vsel %vm579, %v1033, %v1037
        %v1040 = vsel %vm579, %v1035, %v1031
        %v1041 = vsel %vm579, %v1037, %v1033
        %v1042 = vld [vmem:[%s584] sm:$0xff]
        %v1043 = vld [vmem:[%s584 + $0x8] sm:$0xff]
        %v1044 = vld [vmem:[%s584 + $0x10] sm:$0xff]
        %v1045 = vld [vmem:[%s584 + $0x18] sm:$0xff]
        %v1046 = vmul.f32 %v1038, %v1042
        %v1047 = vmul.f32 %v1040, %v1043
        %v1048 = vmul.f32 %v1039, %v1044
        %v1049 = vmul.f32 %v1041, %v1045
        %v1050 = vadd.f32 %v1026, %v1046
        %v1051 = vadd.f32 %v1027, %v1047
        %v1052 = vadd.f32 %v1028, %v1048
        %v1053 = vadd.f32 %v1029, %v1049
        %1054 = vrot.lane.b32.xlu0 %v874, 111
        %v1055 = vpop.permute.xlu0 %1054
        %1056 = vrot.lane.b32.xlu0 %v876, 111
        %v1057 = vpop.permute.xlu0 %1056
        %1058 = vrot.lane.b32.xlu0 %v875, 111
        %v1059 = vpop.permute.xlu0 %1058
        %1060 = vrot.lane.b32.xlu0 %v877, 111
        %v1061 = vpop.permute.xlu0 %1060
        %v1062 = vsel %vm605, %v1055, %v1059
        %v1063 = vsel %vm605, %v1057, %v1061
        %v1064 = vsel %vm605, %v1059, %v1055
        %v1065 = vsel %vm605, %v1061, %v1057
        %v1066 = vld [vmem:[%s610] sm:$0xff]
        %v1067 = vld [vmem:[%s610 + $0x8] sm:$0xff]
        %v1068 = vld [vmem:[%s610 + $0x10] sm:$0xff]
        %v1069 = vld [vmem:[%s610 + $0x18] sm:$0xff]
        %v1070 = vmul.f32 %v1062, %v1066
        %v1071 = vmul.f32 %v1064, %v1067
        %v1072 = vmul.f32 %v1063, %v1068
        %v1073 = vmul.f32 %v1065, %v1069
        %v1074 = vadd.f32 %v1050, %v1070
        %v1075 = vadd.f32 %v1051, %v1071
        %v1076 = vadd.f32 %v1052, %v1072
        %v1077 = vadd.f32 %v1053, %v1073
        %1078 = vrot.lane.b32.xlu0 %v1074, 17
        %v1079 = vpop.permute.xlu0 %1078
        %1080 = vrot.lane.b32.xlu0 %v1076, 17
        %v1081 = vpop.permute.xlu0 %1080
        %1082 = vrot.lane.b32.xlu0 %v1075, 17
        %v1083 = vpop.permute.xlu0 %1082
        %1084 = vrot.lane.b32.xlu0 %v1077, 17
        %v1085 = vpop.permute.xlu0 %1084
        %v1086 = vsel %vm415, %v1079, %v1083
        %v1087 = vsel %vm415, %v1081, %v1085
        %v1088 = vsel %vm415, %v1083, %v1079
        %v1089 = vsel %vm415, %v1085, %v1081
        %v1090 = vmul.f32 %v1088, %v890
        %v1091 = vmul.f32 %v1086, %v891
        %v1092 = vmul.f32 %v1089, %v892
        %v1093 = vmul.f32 %v1087, %v893
        %1094 = vrot.lane.b32.xlu0 %v1074, 16
        %v1095 = vpop.permute.xlu0 %1094
        %1096 = vrot.lane.b32.xlu0 %v1076, 16
        %v1097 = vpop.permute.xlu0 %1096
        %1098 = vrot.lane.b32.xlu0 %v1075, 16
        %v1099 = vpop.permute.xlu0 %1098
        %1100 = vrot.lane.b32.xlu0 %v1077, 16
        %v1101 = vpop.permute.xlu0 %1100
        %v1102 = vsel %vm436, %v1095, %v1099
        %v1103 = vsel %vm436, %v1097, %v1101
        %v1104 = vsel %vm436, %v1099, %v1095
        %v1105 = vsel %vm436, %v1101, %v1097
        %v1106 = vmul.f32 %v1104, %v910
        %v1107 = vmul.f32 %v1102, %v911
        %v1108 = vmul.f32 %v1105, %v912
        %v1109 = vmul.f32 %v1103, %v913
        %v1110 = vadd.f32 %v1090, %v1106
        %v1111 = vadd.f32 %v1091, %v1107
        %v1112 = vadd.f32 %v1092, %v1108
        %v1113 = vadd.f32 %v1093, %v1109
        %1114 = vrot.lane.b32.xlu0 %v1074, 15
        %v1115 = vpop.permute.xlu0 %1114
        %1116 = vrot.lane.b32.xlu0 %v1076, 15
        %v1117 = vpop.permute.xlu0 %1116
        %1118 = vrot.lane.b32.xlu0 %v1075, 15
        %v1119 = vpop.permute.xlu0 %1118
        %1120 = vrot.lane.b32.xlu0 %v1077, 15
        %v1121 = vpop.permute.xlu0 %1120
        %v1122 = vsel %vm462, %v1115, %v1119
        %v1123 = vsel %vm462, %v1117, %v1121
        %v1124 = vsel %vm462, %v1119, %v1115
        %v1125 = vsel %vm462, %v1121, %v1117
        %v1126 = vmul.f32 %v1124, %v934
        %v1127 = vmul.f32 %v1122, %v935
        %v1128 = vmul.f32 %v1125, %v936
        %v1129 = vmul.f32 %v1123, %v937
        %v1130 = vadd.f32 %v1110, %v1126
        %v1131 = vadd.f32 %v1111, %v1127
        %v1132 = vadd.f32 %v1112, %v1128
        %v1133 = vadd.f32 %v1113, %v1129
        %1134 = vrot.lane.b32.xlu0 %v1074, 1
        %v1135 = vpop.permute.xlu0 %1134
        %1136 = vrot.lane.b32.xlu0 %v1076, 1
        %v1137 = vpop.permute.xlu0 %1136
        %1138 = vrot.lane.b32.xlu0 %v1075, 1
        %v1139 = vpop.permute.xlu0 %1138
        %1140 = vrot.lane.b32.xlu0 %v1077, 1
        %v1141 = vpop.permute.xlu0 %1140
        %v1142 = vsel %vm488, %v1135, %v1139
        %v1143 = vsel %vm488, %v1137, %v1141
        %v1144 = vsel %vm488, %v1139, %v1135
        %v1145 = vsel %vm488, %v1141, %v1137
        %v1146 = vmul.f32 %v1144, %v958
        %v1147 = vmul.f32 %v1142, %v959
        %v1148 = vmul.f32 %v1145, %v960
        %v1149 = vmul.f32 %v1143, %v961
        %v1150 = vadd.f32 %v1130, %v1146
        %v1151 = vadd.f32 %v1131, %v1147
        %v1152 = vadd.f32 %v1132, %v1148
        %v1153 = vadd.f32 %v1133, %v1149
        %v1154 = vmul.f32 %v1074, %v970
        %v1155 = vmul.f32 %v1075, %v971
        %v1156 = vmul.f32 %v1076, %v972
        %v1157 = vmul.f32 %v1077, %v973
        %v1158 = vadd.f32 %v1150, %v1154
        %v1159 = vadd.f32 %v1151, %v1155
        %v1160 = vadd.f32 %v1152, %v1156
        %v1161 = vadd.f32 %v1153, %v1157
        %1162 = vrot.lane.b32.xlu0 %v1074, 127
        %v1163 = vpop.permute.xlu0 %1162
        %1164 = vrot.lane.b32.xlu0 %v1076, 127
        %v1165 = vpop.permute.xlu0 %1164
        %1166 = vrot.lane.b32.xlu0 %v1075, 127
        %v1167 = vpop.permute.xlu0 %1166
        %1168 = vrot.lane.b32.xlu0 %v1077, 127
        %v1169 = vpop.permute.xlu0 %1168
        %v1170 = vsel %vm527, %v1163, %v1167
        %v1171 = vsel %vm527, %v1165, %v1169
        %v1172 = vsel %vm527, %v1167, %v1163
        %v1173 = vsel %vm527, %v1169, %v1165
        %v1174 = vmul.f32 %v1170, %v994
        %v1175 = vmul.f32 %v1172, %v995
        %v1176 = vmul.f32 %v1171, %v996
        %v1177 = vmul.f32 %v1173, %v997
        %v1178 = vadd.f32 %v1158, %v1174
        %v1179 = vadd.f32 %v1159, %v1175
        %v1180 = vadd.f32 %v1160, %v1176
        %v1181 = vadd.f32 %v1161, %v1177
        %1182 = vrot.lane.b32.xlu0 %v1074, 113
        %v1183 = vpop.permute.xlu0 %1182
        %1184 = vrot.lane.b32.xlu0 %v1076, 113
        %v1185 = vpop.permute.xlu0 %1184
        %1186 = vrot.lane.b32.xlu0 %v1075, 113
        %v1187 = vpop.permute.xlu0 %1186
        %1188 = vrot.lane.b32.xlu0 %v1077, 113
        %v1189 = vpop.permute.xlu0 %1188
        %v1190 = vsel %vm553, %v1183, %v1187
        %v1191 = vsel %vm553, %v1185, %v1189
        %v1192 = vsel %vm553, %v1187, %v1183
        %v1193 = vsel %vm553, %v1189, %v1185
        %v1194 = vmul.f32 %v1190, %v1018
        %v1195 = vmul.f32 %v1192, %v1019
        %v1196 = vmul.f32 %v1191, %v1020
        %v1197 = vmul.f32 %v1193, %v1021
        %v1198 = vadd.f32 %v1178, %v1194
        %v1199 = vadd.f32 %v1179, %v1195
        %v1200 = vadd.f32 %v1180, %v1196
        %v1201 = vadd.f32 %v1181, %v1197
        %1202 = vrot.lane.b32.xlu0 %v1074, 112
        %v1203 = vpop.permute.xlu0 %1202
        %1204 = vrot.lane.b32.xlu0 %v1076, 112
        %v1205 = vpop.permute.xlu0 %1204
        %1206 = vrot.lane.b32.xlu0 %v1075, 112
        %v1207 = vpop.permute.xlu0 %1206
        %1208 = vrot.lane.b32.xlu0 %v1077, 112
        %v1209 = vpop.permute.xlu0 %1208
        %v1210 = vsel %vm579, %v1203, %v1207
        %v1211 = vsel %vm579, %v1205, %v1209
        %v1212 = vsel %vm579, %v1207, %v1203
        %v1213 = vsel %vm579, %v1209, %v1205
        %v1214 = vmul.f32 %v1210, %v1042
        %v1215 = vmul.f32 %v1212, %v1043
        %v1216 = vmul.f32 %v1211, %v1044
        %v1217 = vmul.f32 %v1213, %v1045
        %v1218 = vadd.f32 %v1198, %v1214
        %v1219 = vadd.f32 %v1199, %v1215
        %v1220 = vadd.f32 %v1200, %v1216
        %v1221 = vadd.f32 %v1201, %v1217
        %1222 = vrot.lane.b32.xlu0 %v1074, 111
        %v1223 = vpop.permute.xlu0 %1222
        %1224 = vrot.lane.b32.xlu0 %v1076, 111
        %v1225 = vpop.permute.xlu0 %1224
        %1226 = vrot.lane.b32.xlu0 %v1075, 111
        %v1227 = vpop.permute.xlu0 %1226
        %1228 = vrot.lane.b32.xlu0 %v1077, 111
        %v1229 = vpop.permute.xlu0 %1228
        %v1230 = vsel %vm605, %v1223, %v1227
        %v1231 = vsel %vm605, %v1225, %v1229
        %v1232 = vsel %vm605, %v1227, %v1223
        %v1233 = vsel %vm605, %v1229, %v1225
        %v1234 = vmul.f32 %v1230, %v1066
        %v1235 = vmul.f32 %v1232, %v1067
        %v1236 = vmul.f32 %v1231, %v1068
        %v1237 = vmul.f32 %v1233, %v1069
        %v1238 = vadd.f32 %v1218, %v1234
        %v1239 = vadd.f32 %v1219, %v1235
        %v1240 = vadd.f32 %v1220, %v1236
        %v1241 = vadd.f32 %v1221, %v1237
        %v1242 = vadd.f32 %v1074, %v1238
        %v1243 = vadd.f32 %v1075, %v1239
        %v1244 = vadd.f32 %v1076, %v1240
        %v1245 = vadd.f32 %v1077, %v1241
        %v1246 = vpack.c.bf16 %v1244, %v1242
        %v1247 = vpack.c.bf16 %v1245, %v1243
        %1248 = vmatpush.bf16.msra.mxu0 0
        %1249 = vmatpush.bf16.msra.mxu0 0
        %1250 = vmatpush.bf16.msra.mxu0 0
        %1251 = vmatpush.bf16.msra.mxu0 0
        %1252 = vmatpush.bf16.msra.mxu0 0
        %1253 = vmatpush.bf16.msra.mxu0 0
        %1254 = vmatpush.bf16.msra.mxu0 0
        %1255 = vmatpush.bf16.msra.mxu0 %v1246
        %1256 = vmatmul.bf16.gmra.mxu0 %v795
        %v1257 = vpop.f32.mrf.mxu0
        %v1258 = vadd.f32 0.0, %v1257
        %v1259 = vpop.f32.mrf.mxu0
        %1260 = vdwg.mxu0
        %1261 = vmatpush.bf16.msra.mxu0 0
        %1262 = vmatpush.bf16.msra.mxu0 0
        %1263 = vmatpush.bf16.msra.mxu0 0
        %1264 = vmatpush.bf16.msra.mxu0 0
        %1265 = vmatpush.bf16.msra.mxu0 0
        %1266 = vmatpush.bf16.msra.mxu0 0
        %1267 = vmatpush.bf16.msra.mxu0 0
        %1268 = vmatpush.bf16.msra.mxu0 %v1247
        %1269 = vmatmul.bf16.gmra.mxu0 %v795
        %v1270 = vpop.f32.mrf.mxu0
        %v1271 = vadd.f32 0.0, %v1270
        %v1272 = vpop.f32.mrf.mxu0
        %1273 = vdwg.mxu0
        %v1276 = vrot.slane %v1271, 4
        %v1277 = vsel %vm366, %v1258, %v1276
        %s1279 = scalar_lea.vmem %s316, 8 [#allocation7]
        %1280 = vst [vmem:[%s1279] sm:$0xff] %v1277
        %s1281 = sand.u32 %s185, 1
        %s1282 = scalar_lea.sflag [#allocation4], %s1281
        %s1283 = sand.u32 %s185, 1
        %s1284 = smul.addr %s1283, 16
        %s1285 = scalar_lea.vmem [#allocation7], %s1284
        // Predicated region
        $region57: #{tpu_custom_call.1} parent=47 // pred_check
          %p1286 = pneg %p195
        $region58: #{tpu_custom_call.1} parent=47 // pred_check_branch
          %1288 = sbr.rel (%p1286) target = $region60
        $region59: #{tpu_custom_call.1} parent=47 // pred_region
          %s1289 = smul.u32 2, %s25
          %1291 = vsyncadd %s1282, 0
          %s1292 = smul.addr %s1289, 2
          %s1293 = smul.addr %s1292, 4
          %s1294 = scalar_lea.hbm %s7, %s1293
          %s1295 = sshll.u32 %s1285, 4
          %s1296 = int_to_ptr.vmem [resolvable:$true] %s1295
          %s1297 = sshll.u32 %s1294, 4
          %s1298 = int_to_ptr.hbm [resolvable:$true] %s1297
          %1303 = dma.vmem_to_hbm [thread:$0]  %s1296, 256, %s1298, %s1282, 128, 128, 8
        $region60: #{tpu_custom_call.1} parent=47 // pred_fallthru
          _
      $region48: #{tpu_custom_call.1} parent=5 // pred_fallthru
        _
      %p1304 = scmp.le.s32.totalorder 2, %s20
      // Predicated region
      $region61: #{tpu_custom_call.1} parent=5 // pred_check
        %p1305 = pneg %p1304
      $region62: #{tpu_custom_call.1} parent=5 // pred_check_branch
        %1307 = sbr.rel (%p1305) target = $region64
      $region63: #{tpu_custom_call.1} parent=5 // pred_region
        %s1308 = ssub.s32 %s20, 2
        // Predicated region
        $region65: #{tpu_custom_call.1} parent=63 // pred_check
          %p1309 = pneg %p201
        $region66: #{tpu_custom_call.1} parent=63 // pred_check_branch
          %1311 = sbr.rel (%p1309) target = $region68
        $region67: #{tpu_custom_call.1} parent=63 // pred_region
          %s1312 = sand.u32 %s186, 1
          %s1313 = scalar_lea.sflag [#allocation4], %s1312
          %s1314 = sand.u32 %s186, 1
          %s1315 = smul.addr %s1314, 16
          %s1316 = scalar_lea.vmem [#allocation7], %s1315
          %1318 = dma.done %s1313, 256
        $region68: #{tpu_custom_call.1} parent=63 // pred_fallthru
          _
      $region64: #{tpu_custom_call.1} parent=5 // pred_fallthru
        _
    $region6: #{tpu_custom_call.1} parent=1 // loop_footer
      %s24 = sadd.s32 1, %s20
    $region7: #{tpu_custom_call.1} parent=1 // loop_footer_branch
      %19 = sbr.rel target = $region3
    $region8: #{tpu_custom_call.1} parent=1 // loop_exit
      _
    %1319 = vsyncpa [#allocation3], 1
    %s1320 = scalar_lea.sflag [#allocation3], 1
    %1321 = vsyncpa %s1320, 1
    %1322 = vsyncpa [#allocation6], 1
    %1323 = vsyncpa [#allocation4], 1
    %s1324 = scalar_lea.sflag [#allocation4], 1
    %1325 = vsyncpa %s1324, 1

</llo_original>
